<compile_context>
chip_gen: v6e
topology: v6e:2x2x1
jax: 0.10.0
libtpu: 0.0.40
codegen_flags: <defaults>
</compile_context>

<pallas_src>
import functools

import jax
import jax.numpy as jnp
import numpy as np
from jax.experimental import pallas as pl
from jax.experimental.pallas import tpu as pltpu

EPS = 1e-5
MAX_FULL_K = 2048          # up to this K the contraction is one full-K block


def _round_up(x, m):
    return (x + m - 1) // m * m


def _pick_tile(dim_p, candidates, prefer_two_blocks=False):
    """Largest candidate dividing dim_p (optionally preferring >= 2 blocks)."""
    if prefer_two_blocks:
        for t in candidates:
            if dim_p % t == 0 and dim_p // t >= 2:
                return t
    for t in candidates:
        if dim_p % t == 0:
            return t
    return 128


def _vmem_cap_bytes():
    """Generation-aware scoped-VMEM budget (v5e/v6e: 128 MiB, v7x: 64 MiB)."""
    cap = 64 * 1024 * 1024
    try:
        cap = int(pltpu.get_tpu_info().vmem_capacity_bytes)
    except Exception:   # query unavailable -> conservative default (fits all gens)
        pass
    return max(min(int(cap * 0.75), cap - 16 * 1024 * 1024), 16 * 1024 * 1024)


# ----------------------------------------------------------------------------
# Pallas kernel: matmul + folded-BN shift + (residual | fused 1x1 shortcut) + relu
# ----------------------------------------------------------------------------
def _matmul_bn_kernel(*refs, apply_relu, res_mode, multi_k):
    """refs = [p, w, shift] (+ [res] | [xs, ws, bs]) + [out] (+ [acc scratch])."""
    if multi_k:
        o_ref, acc_ref = refs[-2], refs[-1]
        in_refs = refs[:-2]
    else:
        o_ref = refs[-1]
        in_refs = refs[:-1]

    p_ref, w_ref, shift_ref = in_refs[:3]
    if res_mode == "add":
        res_ref = in_refs[3]
    elif res_mode == "conv":
        xs_ref, ws_ref, bs_ref = in_refs[3:6]

    def epilogue(acc):
        acc = acc + shift_ref[...]                            # folded-BN shift (f32)
        if res_mode == "add":
            acc = acc + res_ref[...].astype(jnp.float32)      # identity residual
        elif res_mode == "conv":
            # fused 1x1 projection shortcut: x_tile @ (Ws*bn_scale) + bn_shift
            acc = acc + jnp.dot(xs_ref[...], ws_ref[...],
                                preferred_element_type=jnp.float32)
            acc = acc + bs_ref[...]
        if apply_relu:
            acc = jnp.maximum(acc, 0.0)
        return acc.astype(o_ref.dtype)

    if not multi_k:
        # Single full-K block: no reduction axis, no accumulator scratch.
        o_ref[...] = epilogue(jnp.dot(p_ref[...], w_ref[...],
                                      preferred_element_type=jnp.float32))
    else:
        k = pl.program_id(2)

        @pl.when(k == 0)
        def _init():
            acc_ref[...] = jnp.zeros_like(acc_ref)

        acc_ref[...] += jnp.dot(p_ref[...], w_ref[...],
                                preferred_element_type=jnp.float32)

        @pl.when(k == pl.num_programs(2) - 1)
        def _finalize():
            o_ref[...] = epilogue(acc_ref[...])


def conv_bn_pallas(patches, w_mat, shift, *, residual=None, shortcut=None,
                   apply_relu=True, out_dtype=jnp.float32):
    """relu( patches @ (W*bn_scale) + bn_shift [+ residual | + x@(Ws*scale)+shift_s] ).

    patches : (M, K) bf16 im2col matrix
    w_mat   : (K, Cout) f32 weight matrix with BN scale folded into the columns
    shift   : (Cout,)  f32 folded-BN shift
    residual: optional (M, Cout) identity residual (added in f32)
    shortcut: optional (xs (M, Cin), ws (Cin, Cout) f32, bs (Cout,) f32) -- fused
              1x1 conv + BN projection shortcut, evaluated in the epilogue
    returns : (M, Cout) out_dtype
    """
    assert residual is None or shortcut is None
    M, K = patches.shape
    Kw, cout = w_mat.shape
    assert Kw == K

    cout_p = _round_up(cout, 128)          # lane-dense output; nothing more
    m_p = _round_up(M, 128)

    # ---- tile selection ------------------------------------------------------
    cap = _vmem_cap_bytes()
    tn = _pick_tile(cout_p, (512, 256, 128))
    if K <= MAX_FULL_K:                    # full-K block: no k grid axis
        k_p = tk = _round_up(K, 8)         # sublane-align only (cheap, exact)
    else:
        k_p = _round_up(K, 512)
        tk = _pick_tile(k_p, (2048, 1024, 512))
    nk = k_p // tk
    tm = _pick_tile(m_p, (1024, 512, 256, 128), prefer_two_blocks=True)

    cin_sc = shortcut[0].shape[1] if shortcut is not None else 0
    cin_p = _round_up(cin_sc, 8) if shortcut is not None else 0
    out_bytes = np.dtype(out_dtype).itemsize

    def _live_bytes(tm_, tk_, nk_):
        b = 2 * tm_ * tk_ * 2 + 2 * tk_ * tn * 2 + 2 * tn * 4
        b += 2 * tm_ * tn * out_bytes
        if residual is not None:
            b += 2 * tm_ * tn * 2
        if shortcut is not None:
            b += 2 * (tm_ * cin_p * 2 + cin_p * tn * 2 + tn * 4)
        if nk_ > 1:
            b += tm_ * tn * 4
        return b

    while tm > 128 and _live_bytes(tm, tk, nk) > cap:
        tm //= 2
    while nk > 1 and tk > 512 and _live_bytes(tm, tk, nk) > cap:
        tk //= 2
        nk = k_p // tk

    # ---- pad (only where needed) + cast (bf16 operands, f32 shift) -----------
    p_pad = patches.astype(jnp.bfloat16)
    if m_p != M or k_p != K:
        p_pad = jnp.pad(p_pad, ((0, m_p - M), (0, k_p - K)))
    w_pad = w_mat
    if k_p != K or cout_p != cout:
        w_pad = jnp.pad(w_pad, ((0, k_p - K), (0, cout_p - cout)))
    w_pad = w_pad.astype(jnp.bfloat16)
    shift_pad = shift.reshape(1, cout).astype(jnp.float32)
    if cout_p != cout:
        shift_pad = jnp.pad(shift_pad, ((0, 0), (0, cout_p - cout)))

    multi_k = nk > 1
    if multi_k:
        im_p = lambda i, j, k: (i, k)
        im_w = lambda i, j, k: (k, j)
        im_col = lambda i, j, k: (0, j)      # k-invariant: one DMA per (i, j)
        im_row = lambda i, j, k: (i, 0)      # k-invariant
        im_out = lambda i, j, k: (i, j)
        grid = (m_p // tm, cout_p // tn, nk)
        dims = ("parallel", "parallel", "arbitrary")
        scratch = [pltpu.VMEM((tm, tn), jnp.float32)]
    else:
        im_p = lambda i, j: (i, 0)
        im_w = lambda i, j: (0, j)
        im_col = lambda i, j: (0, j)
        im_row = lambda i, j: (i, 0)
        im_out = lambda i, j: (i, j)
        grid = (m_p // tm, cout_p // tn)
        dims = ("parallel", "parallel")
        scratch = []

    args = [p_pad, w_pad, shift_pad]
    in_specs = [
        pl.BlockSpec((tm, tk), im_p),
        pl.BlockSpec((tk, tn), im_w),
        pl.BlockSpec((1, tn), im_col),
    ]

    res_mode = "none"
    extra_bytes = 0
    if residual is not None:
        res_mode = "add"
        r = residual.astype(jnp.bfloat16)
        if m_p != M or cout_p != cout:
            r = jnp.pad(r, ((0, m_p - M), (0, cout_p - cout)))
        args.append(r)
        in_specs.append(pl.BlockSpec((tm, tn), im_out))
        extra_bytes = m_p * cout_p * 2
    elif shortcut is not None:
        res_mode = "conv"
        xs, ws, bs = shortcut
        xs_pad = xs.astype(jnp.bfloat16)
        if m_p != M or cin_p != cin_sc:
            xs_pad = jnp.pad(xs_pad, ((0, m_p - M), (0, cin_p - cin_sc)))
        ws_pad = ws
        if cin_p != cin_sc or cout_p != cout:
            ws_pad = jnp.pad(ws_pad, ((0, cin_p - cin_sc), (0, cout_p - cout)))
        ws_pad = ws_pad.astype(jnp.bfloat16)
        bs_pad = bs.reshape(1, cout).astype(jnp.float32)
        if cout_p != cout:
            bs_pad = jnp.pad(bs_pad, ((0, 0), (0, cout_p - cout)))
        args += [xs_pad, ws_pad, bs_pad]
        in_specs += [
            pl.BlockSpec((tm, cin_p), im_row),
            pl.BlockSpec((cin_p, tn), im_col),
            pl.BlockSpec((1, tn), im_col),
        ]
        extra_bytes = m_p * cin_p * 2 + cin_p * cout_p * 2 + cout_p * 4

    cost = pl.CostEstimate(
        flops=2 * m_p * k_p * cout_p
        + (2 * m_p * cin_p * cout_p if shortcut is not None else 0),
        transcendentals=0,
        bytes_accessed=(m_p * k_p * 2 + k_p * cout_p * 2 + cout_p * 4
                        + m_p * cout_p * out_bytes + extra_bytes),
    )

    kernel = functools.partial(_matmul_bn_kernel, apply_relu=apply_relu,
                               res_mode=res_mode, multi_k=multi_k)

    out = pl.pallas_call(
        kernel,
        out_shape=jax.ShapeDtypeStruct((m_p, cout_p), out_dtype),
        grid_spec=pltpu.PrefetchScalarGridSpec(
            num_scalar_prefetch=0,
            grid=grid,
            in_specs=in_specs,
            out_specs=pl.BlockSpec((tm, tn), im_out),
            scratch_shapes=scratch,
        ),
        compiler_params=pltpu.CompilerParams(
            dimension_semantics=dims,
            vmem_limit_bytes=cap,
        ),
        cost_estimate=cost,
    )(*args)

    if m_p != M or cout_p != cout:
        out = out[:M, :cout]
    return out


# ----------------------------------------------------------------------------
# Plain-JAX glue: im2col (bf16), weight reshaping, BN folding
# ----------------------------------------------------------------------------
def im2col(x_nhwc, ksize, stride, padding):
    """(N,H,W,C) -> ((N*Ho*Wo, ksize*ksize*C), (N, Ho, Wo)); keeps x's dtype."""
    n, h, w, c = x_nhwc.shape
    xp = jnp.pad(x_nhwc, ((0, 0), (padding, padding), (padding, padding), (0, 0)))
    ho = (h + 2 * padding - ksize) // stride + 1
    wo = (w + 2 * padding - ksize) // stride + 1
    cols = []
    for kh in range(ksize):
        for kw in range(ksize):
            cols.append(xp[:, kh:kh + ho * stride:stride, kw:kw + wo * stride:stride, :])
    patches = jnp.concatenate(cols, axis=-1) if len(cols) > 1 else cols[0]
    return patches.reshape(n * ho * wo, ksize * ksize * c), (n, ho, wo)


def weight_oihw_to_mat(w_oihw):
    # (Cout, Cin, KH, KW) -> (KH*KW*Cin, Cout), matching im2col patch ordering.
    cout, cin, kh, kw = w_oihw.shape
    return jnp.transpose(w_oihw, (2, 3, 1, 0)).reshape(kh * kw * cin, cout)


def fold_bn(gamma, beta, mean, var):
    scale = gamma / jnp.sqrt(var + EPS)
    shift = beta - mean * scale
    return scale, shift


# ----------------------------------------------------------------------------
# WideBasicBlock forward (NCHW in / NCHW out), conv hot path in Pallas kernels
# ----------------------------------------------------------------------------
def wide_basic_block_forward(x_nchw, params, stride):
    # bf16 activations on the HBM side (halves im2col traffic); f32 math in-kernel.
    x = jnp.transpose(x_nchw, (0, 2, 3, 1)).astype(jnp.bfloat16)   # NHWC
    n, h, w, cin = x.shape
    cmid = params["w1"].shape[0]

    s1, b1 = fold_bn(*params["bn1"])
    s2, b2 = fold_bn(*params["bn2"])

    # conv1 (3x3, stride, pad 1) + bn1 + relu; BN scale folded into the weights.
    p1, (n1, ho, wo) = im2col(x, 3, stride, 1)
    w1_mat = weight_oihw_to_mat(params["w1"]) * s1[None, :]
    out1 = conv_bn_pallas(p1, w1_mat, b1, apply_relu=True, out_dtype=jnp.bfloat16)
    out1_nhwc = out1.reshape(n1, ho, wo, cmid)

    # conv2 (3x3, stride 1, pad 1) + bn2 + shortcut + relu, all in one kernel.
    p2, _ = im2col(out1_nhwc, 3, 1, 1)
    w2_mat = weight_oihw_to_mat(params["w2"]) * s2[None, :]

    if params.get("ws") is not None:
        # 1x1 projection shortcut fused into conv2's epilogue (no HBM round trip).
        ss, bs = fold_bn(*params["bns"])
        xs, _ = im2col(x, 1, stride, 0)                       # (M, Cin) bf16
        ws_mat = weight_oihw_to_mat(params["ws"]) * ss[None, :]
        out2 = conv_bn_pallas(p2, w2_mat, b2, shortcut=(xs, ws_mat, bs),
                              apply_relu=True, out_dtype=jnp.float32)
    else:
        assert stride == 1 and cin == cmid, (
            "identity shortcut requires stride==1 and in_channels==out_channels*width")
        res = x.reshape(n * h * w, cin)                       # identity residual
        out2 = conv_bn_pallas(p2, w2_mat, b2, residual=res,
                              apply_relu=True, out_dtype=jnp.float32)

    out_nhwc = out2.reshape(n1, ho, wo, cmid)
    return jnp.transpose(out_nhwc, (0, 3, 1, 2))              # back to NCHW, f32


# ----------------------------------------------------------------------------
# Pure-JAX reference (lax.conv, f32) for correctness check
# ----------------------------------------------------------------------------
def reference_forward(x_nchw, params, stride):
    x = jnp.transpose(x_nchw, (0, 2, 3, 1)).astype(jnp.float32)

    def conv(x, w_oihw, s, pad):
        w = jnp.transpose(w_oihw, (2, 3, 1, 0))   # HWIO
        return jax.lax.conv_general_dilated(
            x, w, (s, s), [(pad, pad), (pad, pad)],
            dimension_numbers=("NHWC", "HWIO", "NHWC"))

    def bn(x, g, b, m, v):
        return (x - m) / jnp.sqrt(v + EPS) * g + b

    out = jax.nn.relu(bn(conv(x, params["w1"], stride, 1), *params["bn1"]))
    out = bn(conv(out, params["w2"], 1, 1), *params["bn2"])
    if params.get("ws") is not None:
        sc = bn(conv(x, params["ws"], stride, 0), *params["bns"])
    else:
        sc = x
    out = jax.nn.relu(out + sc)
    return jnp.transpose(out, (0, 3, 1, 2))


# ----------------------------------------------------------------------------
# Deterministic parameter construction (shapes follow WideBasicBlock.__init__)
# ----------------------------------------------------------------------------
def make_params(key, in_channels, out_channels, stride, width=4):
    cmid = out_channels * width
    ks = jax.random.split(key, 16)

    def bn_params(k, c):
        k1, k2, k3, k4 = jax.random.split(k, 4)
        gamma = jax.random.uniform(k1, (c,), minval=0.5, maxval=1.5)
        beta = jax.random.normal(k2, (c,)) * 0.1
        mean = jax.random.normal(k3, (c,)) * 0.1
        var = jax.random.uniform(k4, (c,), minval=0.5, maxval=1.5)
        return (gamma, beta, mean, var)

    params = {
        "w1": jax.random.normal(ks[0], (cmid, in_channels, 3, 3)) * 0.1,
        "bn1": bn_params(ks[1], cmid),
        "w2": jax.random.normal(ks[2], (cmid, cmid, 3, 3)) * 0.1,
        "bn2": bn_params(ks[3], cmid),
        "ws": None,
        "bns": None,
    }
    if stride != 1 or in_channels != cmid:
        params["ws"] = jax.random.normal(ks[4], (cmid, in_channels, 1, 1)) * 0.1
        params["bns"] = bn_params(ks[5], cmid)
    return params


if __name__ == "__main__":
    key = jax.random.PRNGKey(0)
    forward = jax.jit(wide_basic_block_forward, static_argnums=(2,))

    configs = [
        # (in_channels, out_channels, stride) ; cmid = out_channels * width(=4)
        (4, 4, 1),    # projection (1x1 conv + BN) shortcut, fused into conv2
        (16, 4, 1),   # identity shortcut (plain residual add)
        (8, 4, 2),    # strided projection shortcut
    ]
    for cin, cout, stride in configs:
        key, k_x, k_p = jax.random.split(key, 3)
        x = jax.random.normal(k_x, (2, cin, 16, 16), dtype=jnp.float32)   # NCHW
        params = make_params(k_p, cin, cout, stride)

        out = jax.block_until_ready(forward(x, params, stride))
        ref = jax.block_until_ready(reference_forward(x, params, stride))

        assert out.shape == ref.shape
        # bf16 activations / MXU operands (f32 accumulation) vs f32 reference.
        np.testing.assert_allclose(np.asarray(out), np.asarray(ref),
                                   rtol=3e-2, atol=3e-2)

    print("KERNEL_OK")
</pallas_src>

<mosaic_0001>
module attributes {stable_mosaic.version = 11 : i64} {
  func.func @_matmul_bn_kernel(%arg0: i32, %arg1: i32, %arg2: memref<256x40xbf16, #tpu.memory_space<vmem>>, %arg3: memref<40x128xbf16, #tpu.memory_space<vmem>>, %arg4: memref<1x128xf32, #tpu.memory_space<vmem>>, %arg5: memref<256x128xbf16, #tpu.memory_space<vmem>>) attributes {dimension_semantics = [#tpu.dimension_semantics<parallel>, #tpu.dimension_semantics<parallel>], iteration_bounds = array<i64: 2, 1>, scalar_prefetch = 0 : i64, scratch_operands = 0 : i64, tpu.core_type = #tpu.core_type<tc>, window_params = [{transform_indices = @transform_0, window_bounds = array<i64: 256, 40>}, {transform_indices = @transform_1, window_bounds = array<i64: 40, 128>}, {transform_indices = @transform_2, window_bounds = array<i64: 1, 128>}, {transform_indices = @transform_3, window_bounds = array<i64: 256, 128>}]} {
    %c0 = arith.constant 0 : index
    %c0_0 = arith.constant 0 : index
    %0 = vector.load %arg2[%c0, %c0_0] : memref<256x40xbf16, #tpu.memory_space<vmem>>, vector<256x40xbf16>
    %c0_1 = arith.constant 0 : index
    %c0_2 = arith.constant 0 : index
    %1 = vector.load %arg3[%c0_1, %c0_2] : memref<40x128xbf16, #tpu.memory_space<vmem>>, vector<40x128xbf16>
    %cst = arith.constant dense<0.000000e+00> : vector<256x128xf32>
    %2 = tpu.matmul %0, %1, %cst {dimension_numbers = #tpu.dot_dimension_numbers<[1], [0], [0], [1], [0, 0, 1, 1], [], []>} : vector<256x40xbf16>, vector<40x128xbf16>, vector<256x128xf32> -> vector<256x128xf32>
    %c0_3 = arith.constant 0 : index
    %c0_4 = arith.constant 0 : index
    %3 = vector.load %arg4[%c0_3, %c0_4] : memref<1x128xf32, #tpu.memory_space<vmem>>, vector<1x128xf32>
    %4 = vector.broadcast %3 : vector<1x128xf32> to vector<256x128xf32>
    %5 = arith.addf %2, %4 : vector<256x128xf32>
    %cst_5 = arith.constant 0.000000e+00 : f32
    %6 = vector.broadcast %cst_5 : f32 to vector<256x128xf32>
    %7 = arith.maximumf %5, %6 : vector<256x128xf32>
    %8 = arith.truncf %7 : vector<256x128xf32> to vector<256x128xbf16>
    %c0_6 = arith.constant 0 : index
    %c0_7 = arith.constant 0 : index
    %9 = vector.load %arg5[%c0_6, %c0_7] : memref<256x128xbf16, #tpu.memory_space<vmem>>, vector<256x128xbf16>
    tpu.vector_store %arg5[%c0_6, %c0_7], %8 {strides = array<i32>} : memref<256x128xbf16, #tpu.memory_space<vmem>>, vector<256x128xbf16>,
    return
  }
  func.func @transform_0(%arg0: i32, %arg1: i32) -> (i32, i32) {
    %c0_i32 = arith.constant 0 : i32
    %c0_i32_0 = arith.constant 0 : i32
    return %arg0, %c0_i32 : i32, i32
  }
  func.func @transform_1(%arg0: i32, %arg1: i32) -> (i32, i32) {
    %c0_i32 = arith.constant 0 : i32
    %c0_i32_0 = arith.constant 0 : i32
    return %c0_i32, %arg1 : i32, i32
  }
  func.func @transform_2(%arg0: i32, %arg1: i32) -> (i32, i32) {
    %c0_i32 = arith.constant 0 : i32
    %c0_i32_0 = arith.constant 0 : i32
    return %c0_i32, %arg1 : i32, i32
  }
  func.func @transform_3(%arg0: i32, %arg1: i32) -> (i32, i32) {
    %c0_i32 = arith.constant 0 : i32
    return %arg0, %arg1 : i32, i32
  }
}

module attributes {stable_mosaic.version = 11 : i64} {
  func.func @_matmul_bn_kernel(%arg0: i32, %arg1: i32, %arg2: memref<256x144xbf16, #tpu.memory_space<vmem>>, %arg3: memref<144x128xbf16, #tpu.memory_space<vmem>>, %arg4: memref<1x128xf32, #tpu.memory_space<vmem>>, %arg5: memref<256x8xbf16, #tpu.memory_space<vmem>>, %arg6: memref<8x128xbf16, #tpu.memory_space<vmem>>, %arg7: memref<1x128xf32, #tpu.memory_space<vmem>>, %arg8: memref<256x128xf32, #tpu.memory_space<vmem>>) attributes {dimension_semantics = [#tpu.dimension_semantics<parallel>, #tpu.dimension_semantics<parallel>], iteration_bounds = array<i64: 2, 1>, scalar_prefetch = 0 : i64, scratch_operands = 0 : i64, tpu.core_type = #tpu.core_type<tc>, window_params = [{transform_indices = @transform_0, window_bounds = array<i64: 256, 144>}, {transform_indices = @transform_1, window_bounds = array<i64: 144, 128>}, {transform_indices = @transform_2, window_bounds = array<i64: 1, 128>}, {transform_indices = @transform_3, window_bounds = array<i64: 256, 8>}, {transform_indices = @transform_4, window_bounds = array<i64: 8, 128>}, {transform_indices = @transform_5, window_bounds = array<i64: 1, 128>}, {transform_indices = @transform_6, window_bounds = array<i64: 256, 128>}]} {
    %c0 = arith.constant 0 : index
    %c0_0 = arith.constant 0 : index
    %0 = vector.load %arg2[%c0, %c0_0] : memref<256x144xbf16, #tpu.memory_space<vmem>>, vector<256x144xbf16>
    %c0_1 = arith.constant 0 : index
    %c0_2 = arith.constant 0 : index
    %1 = vector.load %arg3[%c0_1, %c0_2] : memref<144x128xbf16, #tpu.memory_space<vmem>>, vector<144x128xbf16>
    %cst = arith.constant dense<0.000000e+00> : vector<256x128xf32>
    %2 = tpu.matmul %0, %1, %cst {dimension_numbers = #tpu.dot_dimension_numbers<[1], [0], [0], [1], [0, 0, 1, 1], [], []>} : vector<256x144xbf16>, vector<144x128xbf16>, vector<256x128xf32> -> vector<256x128xf32>
    %c0_3 = arith.constant 0 : index
    %c0_4 = arith.constant 0 : index
    %3 = vector.load %arg4[%c0_3, %c0_4] : memref<1x128xf32, #tpu.memory_space<vmem>>, vector<1x128xf32>
    %4 = vector.broadcast %3 : vector<1x128xf32> to vector<256x128xf32>
    %5 = arith.addf %2, %4 : vector<256x128xf32>
    %c0_5 = arith.constant 0 : index
    %c0_6 = arith.constant 0 : index
    %6 = vector.load %arg5[%c0_5, %c0_6] : memref<256x8xbf16, #tpu.memory_space<vmem>>, vector<256x8xbf16>
    %c0_7 = arith.constant 0 : index
    %c0_8 = arith.constant 0 : index
    %7 = vector.load %arg6[%c0_7, %c0_8] : memref<8x128xbf16, #tpu.memory_space<vmem>>, vector<8x128xbf16>
    %cst_9 = arith.constant dense<0.000000e+00> : vector<256x128xf32>
    %8 = tpu.matmul %6, %7, %cst_9 {dimension_numbers = #tpu.dot_dimension_numbers<[1], [0], [0], [1], [0, 0, 1, 1], [], []>} : vector<256x8xbf16>, vector<8x128xbf16>, vector<256x128xf32> -> vector<256x128xf32>
    %9 = arith.addf %5, %8 : vector<256x128xf32>
    %c0_10 = arith.constant 0 : index
    %c0_11 = arith.constant 0 : index
    %10 = vector.load %arg7[%c0_10, %c0_11] : memref<1x128xf32, #tpu.memory_space<vmem>>, vector<1x128xf32>
    %11 = vector.broadcast %10 : vector<1x128xf32> to vector<256x128xf32>
    %12 = arith.addf %9, %11 : vector<256x128xf32>
    %cst_12 = arith.constant 0.000000e+00 : f32
    %13 = vector.broadcast %cst_12 : f32 to vector<256x128xf32>
    %14 = arith.maximumf %12, %13 : vector<256x128xf32>
    %c0_13 = arith.constant 0 : index
    %c0_14 = arith.constant 0 : index
    %15 = vector.load %arg8[%c0_13, %c0_14] : memref<256x128xf32, #tpu.memory_space<vmem>>, vector<256x128xf32>
    tpu.vector_store %arg8[%c0_13, %c0_14], %14 {strides = array<i32>} : memref<256x128xf32, #tpu.memory_space<vmem>>, vector<256x128xf32>,
    return
  }
  func.func @transform_0(%arg0: i32, %arg1: i32) -> (i32, i32) {
    %c0_i32 = arith.constant 0 : i32
    %c0_i32_0 = arith.constant 0 : i32
    return %arg0, %c0_i32 : i32, i32
  }
  func.func @transform_1(%arg0: i32, %arg1: i32) -> (i32, i32) {
    %c0_i32 = arith.constant 0 : i32
    %c0_i32_0 = arith.constant 0 : i32
    return %c0_i32, %arg1 : i32, i32
  }
  func.func @transform_2(%arg0: i32, %arg1: i32) -> (i32, i32) {
    %c0_i32 = arith.constant 0 : i32
    %c0_i32_0 = arith.constant 0 : i32
    return %c0_i32, %arg1 : i32, i32
  }
  func.func @transform_3(%arg0: i32, %arg1: i32) -> (i32, i32) {
    %c0_i32 = arith.constant 0 : i32
    %c0_i32_0 = arith.constant 0 : i32
    return %arg0, %c0_i32 : i32, i32
  }
  func.func @transform_4(%arg0: i32, %arg1: i32) -> (i32, i32) {
    %c0_i32 = arith.constant 0 : i32
    %c0_i32_0 = arith.constant 0 : i32
    return %c0_i32, %arg1 : i32, i32
  }
  func.func @transform_5(%arg0: i32, %arg1: i32) -> (i32, i32) {
    %c0_i32 = arith.constant 0 : i32
    %c0_i32_0 = arith.constant 0 : i32
    return %c0_i32, %arg1 : i32, i32
  }
  func.func @transform_6(%arg0: i32, %arg1: i32) -> (i32, i32) {
    %c0_i32 = arith.constant 0 : i32
    return %arg0, %arg1 : i32, i32
  }
}

</mosaic_0001>

<llo_original>
// kernel: wide_basic_block_forward.2
$region0: #{wide_basic_block_forward.2}
  #allocation0 [shape = 'u32[]', space=smem, size = 0x4, offset = 0x4, fixed_abs, tag = 'smem constant byte address 0x4 - core index']
  #allocation1 [shape = 'u32[144,128]{1,0:T(1,128)}', space=vmem, size = 0x12000, scoped, tag = 'internal scratch']
  %s0 = inlined_call_operand.vmem [shape: bf16[512,40], index: 0, kind: input, shape index: {}]
  %s1 = inlined_call_operand.vmem [shape: bf16[40,128], index: 1, kind: input, shape index: {}]
  %s2 = inlined_call_operand.vmem [shape: f32[1,128], index: 2, kind: input, shape index: {}]
  %s3 = inlined_call_operand.vmem [shape: bf16[512,128], index: 3, kind: output, shape index: {}]
  %s4 = sld [smem:[#allocation0]]
  $region45: #{wide_basic_block_forward.2} parent=0
    _
  %s6 = ssub.s32 1, %s4
  %s7 = scalar_select 0, %s6, %s4
  loop: start=0, step=1, limit=4
  $region2: #{wide_basic_block_forward.2} parent=0 // loop_pre_header
    _
  $region3: #{wide_basic_block_forward.2} parent=0 // loop_header
    %s9 = sphi 0, %s13
    %p10 = scmp.ge.s32.totalorder %s9, 4
    %s16 = sphi 0, %s28
    %s17 = sphi 0, %s24
    %s18 = sphi 0, %s16
    %s19 = sphi 0, %s17
    %s20 = sphi 0, %s18
    %s21 = sphi 0, %s19
    %s31 = sphi 0, %s33
    %s34 = sphi 0, %s31
    %s35 = sphi 0, %s34
    %s51 = sphi 0, %s35
    %s57 = sphi 0, %s59
    %s60 = sphi 0, %s57
    %s61 = sphi 0, %s60
    %s77 = sphi 0, %s61
    %s83 = sphi 0, %s85
    %s86 = sphi 0, %s83
    %s87 = sphi 0, %s86
    %s103 = sphi 0, %s87
    %s111 = sphi 0, %s113
    %s114 = sphi 0, %s111
    %s115 = sphi 0, %s114
    %s131 = sphi 0, %s115
  $region4: #{wide_basic_block_forward.2} parent=0 // loop_header_branch
    %12 = sbr.rel (%p10) target = $region8
  $region5: #{wide_basic_block_forward.2} parent=0 // loop_body
    %s14 = ssub.s32 %s9, 1
    %s15 = ssub.s32 %s9, 2
    %s22 = sadd.s32 1, %s17
    %p23 = scmp.ge.s32.totalorder %s22, 1
    %s24 = scalar_select %p23, 0, %s22
    %s25 = sadd.s32 1, %s16
    %s26 = scalar_select %p23, %s25, %s16
    %p27 = scmp.ge.s32.totalorder %s26, 2
    %s28 = scalar_select %p27, 0, %s26
    %s29 = ssub.s32 %s16, %s28
    %p30 = scmp.eq.s32.totalorder %s29, 0
    %s32 = sadd.s32 %s31, 1
    %s33 = scalar_select %p30, %s31, %s32
    %p36 = pneg %p30
    %p37 = scmp.eq.s32.totalorder %s9, 1
    %p38 = por %p36, %p37
    %p39 = scmp.ne.s32.totalorder %s31, %s34
    %p40 = scmp.eq.s32.totalorder %s9, 0
    %p41 = por %p39, %p40
    %p42 = scmp.ne.s32.totalorder %s31, %s34
    %p43 = scmp.eq.s32.totalorder %s14, 1
    %p44 = por %p42, %p43
    %p45 = scmp.ne.s32.totalorder %s34, %s35
    %p46 = scmp.eq.s32.totalorder %s14, 0
    %p47 = por %p45, %p46
    %p48 = scmp.ne.s32.totalorder %s34, %s35
    %p49 = scmp.eq.s32.totalorder %s15, 1
    %p50 = por %p48, %p49
    %p52 = scmp.ne.s32.totalorder %s35, %s51
    %p53 = scmp.eq.s32.totalorder %s15, 0
    %p54 = por %p52, %p53
    %s55 = ssub.s32 %s17, %s24
    %p56 = scmp.eq.s32.totalorder %s55, 0
    %s58 = sadd.s32 %s57, 1
    %s59 = scalar_select %p56, %s57, %s58
    %p62 = pneg %p56
    %p63 = scmp.eq.s32.totalorder %s9, 1
    %p64 = por %p62, %p63
    %p65 = scmp.ne.s32.totalorder %s57, %s60
    %p66 = scmp.eq.s32.totalorder %s9, 0
    %p67 = por %p65, %p66
    %p68 = scmp.ne.s32.totalorder %s57, %s60
    %p69 = scmp.eq.s32.totalorder %s14, 1
    %p70 = por %p68, %p69
    %p71 = scmp.ne.s32.totalorder %s60, %s61
    %p72 = scmp.eq.s32.totalorder %s14, 0
    %p73 = por %p71, %p72
    %p74 = scmp.ne.s32.totalorder %s60, %s61
    %p75 = scmp.eq.s32.totalorder %s15, 1
    %p76 = por %p74, %p75
    %p78 = scmp.ne.s32.totalorder %s61, %s77
    %p79 = scmp.eq.s32.totalorder %s15, 0
    %p80 = por %p78, %p79
    %s81 = ssub.s32 %s17, %s24
    %p82 = scmp.eq.s32.totalorder %s81, 0
    %s84 = sadd.s32 %s83, 1
    %s85 = scalar_select %p82, %s83, %s84
    %p88 = pneg %p82
    %p89 = scmp.eq.s32.totalorder %s9, 1
    %p90 = por %p88, %p89
    %p91 = scmp.ne.s32.totalorder %s83, %s86
    %p92 = scmp.eq.s32.totalorder %s9, 0
    %p93 = por %p91, %p92
    %p94 = scmp.ne.s32.totalorder %s83, %s86
    %p95 = scmp.eq.s32.totalorder %s14, 1
    %p96 = por %p94, %p95
    %p97 = scmp.ne.s32.totalorder %s86, %s87
    %p98 = scmp.eq.s32.totalorder %s14, 0
    %p99 = por %p97, %p98
    %p100 = scmp.ne.s32.totalorder %s86, %s87
    %p101 = scmp.eq.s32.totalorder %s15, 1
    %p102 = por %p100, %p101
    %p104 = scmp.ne.s32.totalorder %s87, %s103
    %p105 = scmp.eq.s32.totalorder %s15, 0
    %p106 = por %p104, %p105
    %s107 = ssub.s32 %s16, %s28
    %s108 = ssub.s32 %s17, %s24
    %s109 = sor.u32 %s107, %s108
    %p110 = scmp.eq.s32.totalorder %s109, 0
    %s112 = sadd.s32 %s111, 1
    %s113 = scalar_select %p110, %s111, %s112
    %p116 = pneg %p110
    %p117 = scmp.eq.s32.totalorder %s9, 1
    %p118 = por %p116, %p117
    %p119 = scmp.ne.s32.totalorder %s111, %s114
    %p120 = scmp.eq.s32.totalorder %s9, 0
    %p121 = por %p119, %p120
    %p122 = scmp.ne.s32.totalorder %s111, %s114
    %p123 = scmp.eq.s32.totalorder %s14, 1
    %p124 = por %p122, %p123
    %p125 = scmp.ne.s32.totalorder %s114, %s115
    %p126 = scmp.eq.s32.totalorder %s14, 0
    %p127 = por %p125, %p126
    %p128 = scmp.ne.s32.totalorder %s114, %s115
    %p129 = scmp.eq.s32.totalorder %s15, 1
    %p130 = por %p128, %p129
    %p132 = scmp.ne.s32.totalorder %s115, %s131
    %p133 = scmp.eq.s32.totalorder %s15, 0
    %p134 = por %p132, %p133
    %p135 = scmp.le.s32.totalorder 1, %s9
    %p136 = scmp.lt.s32.totalorder %s9, 3
    %p137 = pnand %p135, %p136
    %p138 = pneg %p137
    // Predicated region
    $region9: #{wide_basic_block_forward.2} parent=5 // pred_check
      _
    $region10: #{wide_basic_block_forward.2} parent=5 // pred_check_branch
      %140 = sbr.rel (%p137) target = $region12
    $region11: #{wide_basic_block_forward.2} parent=5 // pred_region
      %s141 = ssub.s32 %s9, 1
      // Predicated region
      $region13: #{wide_basic_block_forward.2} parent=11 // pred_check
        %p142 = pneg %p73
      $region14: #{wide_basic_block_forward.2} parent=11 // pred_check_branch
        %144 = sbr.rel (%p142) target = $region16
      $region15: #{wide_basic_block_forward.2} parent=11 // pred_region
        %p145 = scmp.lt.s32.totalorder %s19, 0
        %s146 = scalar_select %p145, %s19, 0
        %s147 = smul.addr %s146, 4
        %s148 = scalar_lea.vmem %s1, %s147
      $region16: #{wide_basic_block_forward.2} parent=11 // pred_fallthru
        _
      // Predicated region
      $region17: #{wide_basic_block_forward.2} parent=11 // pred_check
        %p149 = pneg %p99
      $region18: #{wide_basic_block_forward.2} parent=11 // pred_check_branch
        %151 = sbr.rel (%p149) target = $region20
      $region19: #{wide_basic_block_forward.2} parent=11 // pred_region
        %p152 = scmp.lt.s32.totalorder %s19, 0
        %s153 = scalar_select %p152, %s19, 0
        %s154 = scalar_lea.vmem %s2, %s153
      $region20: #{wide_basic_block_forward.2} parent=11 // pred_fallthru
        _
    $region12: #{wide_basic_block_forward.2} parent=5 // pred_fallthru
      _
    %p155 = scmp.lt.s32.totalorder %s9, 2
    // Predicated region
    $region21: #{wide_basic_block_forward.2} parent=5 // pred_check
      %p156 = pneg %p155
    $region22: #{wide_basic_block_forward.2} parent=5 // pred_check_branch
      %158 = sbr.rel (%p156) target = $region24
    $region23: #{wide_basic_block_forward.2} parent=5 // pred_region
      // Predicated region
      $region25: #{wide_basic_block_forward.2} parent=23 // pred_check
        %p159 = pneg %p41
      $region26: #{wide_basic_block_forward.2} parent=23 // pred_check_branch
        %161 = sbr.rel (%p159) target = $region28
      $region27: #{wide_basic_block_forward.2} parent=23 // pred_region
        %s162 = smul.u32 32, %s16
        %p163 = scmp.lt.s32.totalorder %s162, 63
        %s164 = scalar_select %p163, %s162, 63
        %s165 = smul.addr %s164, 4
        %s166 = scalar_lea.vmem %s0, %s165
        %s167 = smul.u32 32, %s16
      $region28: #{wide_basic_block_forward.2} parent=23 // pred_fallthru
        _
    $region24: #{wide_basic_block_forward.2} parent=5 // pred_fallthru
      _
    %p168 = scmp.le.s32.totalorder 1, %s9
    %p169 = scmp.lt.s32.totalorder %s9, 3
    %p170 = pnand %p168, %p169
    %p171 = pneg %p170
    // Predicated region
    $region29: #{wide_basic_block_forward.2} parent=5 // pred_check
      _
    $region30: #{wide_basic_block_forward.2} parent=5 // pred_check_branch
      %173 = sbr.rel (%p170) target = $region32
    $region31: #{wide_basic_block_forward.2} parent=5 // pred_region
      %s174 = ssub.s32 %s9, 1
      %s175 = smul.u32 32, %s18
      %p176 = scmp.lt.s32.totalorder %s175, 63
      %s177 = scalar_select %p176, %s175, 63
      %s178 = smul.addr %s177, 4
      %s179 = scalar_lea.vmem %s0, %s178
      %p180 = pneg %p47
      %p181 = pneg %p44
      %p182 = scmp.lt.s32.totalorder %s19, 0
      %s183 = scalar_select %p182, %s19, 0
      %s184 = smul.addr %s183, 4
      %s185 = scalar_lea.vmem %s1, %s184
      %p186 = pneg %p73
      %p187 = pneg %p70
      %p188 = scmp.lt.s32.totalorder %s19, 0
      %s189 = scalar_select %p188, %s19, 0
      %s190 = scalar_lea.vmem %s2, %s189
      %p191 = pneg %p99
      %p192 = pneg %p96
      %p193 = pneg %p127
      %p194 = pneg %p124
      %s195 = smul.u32 32, %s18
      %p196 = scmp.lt.s32.totalorder %s195, 63
      %s197 = scalar_select %p196, %s195, 63
      %p198 = scmp.lt.s32.totalorder %s19, 0
      %s199 = scalar_select %p198, %s19, 0
      %s200 = sadd.s32 %s199, %s197
      %s201 = smul.addr %s200, 4
      %s202 = scalar_lea.vmem %s3, %s201
      %s203 = smul.u32 32, %s18
      %p204 = scmp.lt.s32.totalorder %s203, 63
      %s205 = scalar_select %p204, %s203, 63
      %s206 = smul.addr %s205, 4
      %s207 = scalar_lea.vmem %s0, %s206
      %s208 = smul.u32 32, %s18
      %p209 = scmp.lt.s32.totalorder %s19, 0
      %s210 = scalar_select %p209, %s19, 0
      %s211 = smul.addr %s210, 4
      %s212 = scalar_lea.vmem %s1, %s211
      %p213 = scmp.lt.s32.totalorder %s19, 0
      %s214 = scalar_select %p213, %s19, 0
      %s215 = scalar_lea.vmem %s2, %s214
      %s216 = smul.u32 32, %s18
      %p217 = scmp.lt.s32.totalorder %s216, 63
      %s218 = scalar_select %p217, %s216, 63
      %p219 = scmp.lt.s32.totalorder %s19, 0
      %s220 = scalar_select %p219, %s19, 0
      %s221 = sadd.s32 %s220, %s218
      %s222 = smul.addr %s221, 4
      %s223 = scalar_lea.vmem %s3, %s222
      %s224 = smul.u32 32, %s18
      %v226 = vld [vmem:[%s207] sm:$0xf]
      %v227 = vld [vmem:[%s207 + $0x4] sm:$0xf]
      %v228 = vld [vmem:[%s207 + $0x8] sm:$0xf]
      %v229 = vld [vmem:[%s207 + $0xc] sm:$0xf]
      %v230 = vld [vmem:[%s207 + $0x10] sm:$0xf]
      %v231 = vld [vmem:[%s207 + $0x14] sm:$0xf]
      %v232 = vld [vmem:[%s207 + $0x18] sm:$0xf]
      %v233 = vld [vmem:[%s207 + $0x1c] sm:$0xf]
      %v234 = vld [vmem:[%s207 + $0x20] sm:$0xf]
      %v235 = vld [vmem:[%s207 + $0x24] sm:$0xf]
      %v236 = vld [vmem:[%s207 + $0x28] sm:$0xf]
      %v237 = vld [vmem:[%s207 + $0x2c] sm:$0xf]
      %v238 = vld [vmem:[%s207 + $0x30] sm:$0xf]
      %v239 = vld [vmem:[%s207 + $0x34] sm:$0xf]
      %v240 = vld [vmem:[%s207 + $0x38] sm:$0xf]
      %v241 = vld [vmem:[%s207 + $0x3c] sm:$0xf]
      %v242 = vld [vmem:[%s207 + $0x40] sm:$0xf]
      %v243 = vld [vmem:[%s207 + $0x44] sm:$0xf]
      %v244 = vld [vmem:[%s207 + $0x48] sm:$0xf]
      %v245 = vld [vmem:[%s207 + $0x4c] sm:$0xf]
      %v246 = vld [vmem:[%s207 + $0x50] sm:$0xf]
      %v247 = vld [vmem:[%s207 + $0x54] sm:$0xf]
      %v248 = vld [vmem:[%s207 + $0x58] sm:$0xf]
      %v249 = vld [vmem:[%s207 + $0x5c] sm:$0xf]
      %v250 = vld [vmem:[%s207 + $0x60] sm:$0xf]
      %v251 = vld [vmem:[%s207 + $0x64] sm:$0xf]
      %v252 = vld [vmem:[%s207 + $0x68] sm:$0xf]
      %v253 = vld [vmem:[%s207 + $0x6c] sm:$0xf]
      %v254 = vld [vmem:[%s207 + $0x70] sm:$0xf]
      %v255 = vld [vmem:[%s207 + $0x74] sm:$0xf]
      %v256 = vld [vmem:[%s207 + $0x78] sm:$0xf]
      %v257 = vld [vmem:[%s207 + $0x7c] sm:$0xf]
      %v258 = vld [vmem:[%s212] sm:$0xf]
      %v259 = vld [vmem:[%s212 + $0x4] sm:$0xf]
      %v260 = vld [vmem:[%s212 + $0x8] sm:$0xf]
      %v261 = vld [vmem:[%s212 + $0xc] sm:$0xf]
      %v262 = vld [vmem:[%s212 + $0x10] sm:$0xf]
      %v263 = vld [vmem:[%s215] sm:$0x1]
      %v265 = vlaneseq
      %v266 = vshrl.u32 %v265, 7
      %v267 = vsub.s32 0, %v266
      %v268 = vrot.slane %v263, %v267
      %v302 = vunpack.c.l.b16 %v226
      %v303 = vunpack.c.l.b16 %v227
      %v304 = vunpack.c.l.b16 %v228
      %v305 = vunpack.c.l.b16 %v229
      %v306 = vunpack.c.l.b16 %v230
      %v307 = vunpack.c.l.b16 %v231
      %v308 = vunpack.c.l.b16 %v232
      %v309 = vunpack.c.l.b16 %v233
      %v310 = vunpack.c.l.b16 %v234
      %v311 = vunpack.c.l.b16 %v235
      %v312 = vunpack.c.l.b16 %v236
      %v313 = vunpack.c.l.b16 %v237
      %v314 = vunpack.c.l.b16 %v238
      %v315 = vunpack.c.l.b16 %v239
      %v316 = vunpack.c.l.b16 %v240
      %v317 = vunpack.c.l.b16 %v241
      %v318 = vunpack.c.l.b16 %v242
      %v319 = vunpack.c.l.b16 %v243
      %v320 = vunpack.c.l.b16 %v244
      %v321 = vunpack.c.l.b16 %v245
      %v322 = vunpack.c.l.b16 %v246
      %v323 = vunpack.c.l.b16 %v247
      %v324 = vunpack.c.l.b16 %v248
      %v325 = vunpack.c.l.b16 %v249
      %v326 = vunpack.c.l.b16 %v250
      %v327 = vunpack.c.l.b16 %v251
      %v328 = vunpack.c.l.b16 %v252
      %v329 = vunpack.c.l.b16 %v253
      %v330 = vunpack.c.l.b16 %v254
      %v331 = vunpack.c.l.b16 %v255
      %v332 = vunpack.c.l.b16 %v256
      %v333 = vunpack.c.l.b16 %v257
      %v334 = vpack.c.b16 %v303, %v302
      %v335 = vpack.c.b16 %v305, %v304
      %v336 = vpack.c.b16 %v307, %v306
      %v337 = vpack.c.b16 %v309, %v308
      %v338 = vpack.c.b16 %v311, %v310
      %v339 = vpack.c.b16 %v313, %v312
      %v340 = vpack.c.b16 %v315, %v314
      %v341 = vpack.c.b16 %v317, %v316
      %v342 = vpack.c.b16 %v319, %v318
      %v343 = vpack.c.b16 %v321, %v320
      %v344 = vpack.c.b16 %v323, %v322
      %v345 = vpack.c.b16 %v325, %v324
      %v346 = vpack.c.b16 %v327, %v326
      %v347 = vpack.c.b16 %v329, %v328
      %v348 = vpack.c.b16 %v331, %v330
      %v349 = vpack.c.b16 %v333, %v332
      %v355 = vunpack.c.l.b16 %v258
      %v356 = vunpack.c.l.b16 %v259
      %v357 = vunpack.c.l.b16 %v260
      %v358 = vunpack.c.l.b16 %v261
      %v359 = vunpack.c.l.b16 %v262
      %v360 = vpack.c.b16 %v356, %v355
      %v361 = vpack.c.b16 %v358, %v357
      %v362 = vpack.c.b16 %v359, %v359
      %vm365 = vcmask 326656
      %v367 = vsel %vm365, %v334, 0
      %v370 = vsel %vm365, %v335, 0
      %v373 = vsel %vm365, %v336, 0
      %v376 = vsel %vm365, %v337, 0
      %v379 = vsel %vm365, %v338, 0
      %v382 = vsel %vm365, %v339, 0
      %v385 = vsel %vm365, %v340, 0
      %v388 = vsel %vm365, %v341, 0
      %v391 = vsel %vm365, %v342, 0
      %v394 = vsel %vm365, %v343, 0
      %v397 = vsel %vm365, %v344, 0
      %v400 = vsel %vm365, %v345, 0
      %v403 = vsel %vm365, %v346, 0
      %v406 = vsel %vm365, %v347, 0
      %v409 = vsel %vm365, %v348, 0
      %v412 = vsel %vm365, %v349, 0
      %vm414 = vcmask 1043456
      %v416 = vsel %vm414, %v362, 0
      %418 = vmatprep.subr.bf16.mxu0 0
      %419 = vmatpush1.bf16.msra.mxu0 0
      %420 = vmatprep.subr.bf16.mxu0 0
      %421 = vmatpush1.bf16.msra.mxu0 0
      %422 = vmatprep.subr.bf16.mxu0 0
      %423 = vmatpush1.bf16.msra.mxu0 0
      %424 = vmatprep.subr.bf16.mxu0 0
      %425 = vmatpush1.bf16.msra.mxu0 0
      %426 = vmatprep.subr.bf16.mxu0 0
      %427 = vmatpush1.bf16.msra.mxu0 0
      %428 = vmatprep.subr.bf16.mxu0 0
      %429 = vmatpush1.bf16.msra.mxu0 %v416
      %430 = vmatprep.subr.bf16.mxu0 0
      %431 = vmatpush1.bf16.msra.mxu0 %v361
      %432 = vmatprep.subr.bf16.mxu0 0
      %433 = vmatpush1.bf16.msra.mxu0 %v360
      %434 = vmatprep.subr.bf16.mxu0 0
      %435 = vmatpush2.bf16.msra.mxu0 0
      %436 = vmatprep.subr.bf16.mxu0 0
      %437 = vmatpush2.bf16.msra.mxu0 0
      %438 = vmatprep.subr.bf16.mxu0 0
      %439 = vmatpush2.bf16.msra.mxu0 0
      %440 = vmatprep.subr.bf16.mxu0 0
      %441 = vmatpush2.bf16.msra.mxu0 0
      %442 = vmatprep.subr.bf16.mxu0 0
      %443 = vmatpush2.bf16.msra.mxu0 0
      %444 = vmatprep.subr.bf16.mxu0 0
      %445 = vmatpush2.bf16.msra.mxu0 0
      %446 = vmatprep.subr.bf16.mxu0 0
      %447 = vmatpush2.bf16.msra.mxu0 0
      %448 = vmatprep.subr.bf16.mxu0 0
      %449 = vmatpush2.bf16.msra.mxu0 0
      %450 = vmatprep.mubr.bf16.mxu0 0
      %451 = vmatmul.mubr.bf16.gmra.mxu0 %v367
      %v452 = vpop.f32.mrf.mxu0
      %v453 = vadd.f32 %v268, %v452
      %v454 = vpop.f32.mrf.mxu0
      %v455 = vpop.f32.mrf.mxu0
      %v456 = vadd.f32 %v268, %v455
      %v457 = vpop.f32.mrf.mxu0
      %458 = vmatprep.mubr.bf16.mxu0 0
      %459 = vmatmul.mubr.bf16.gmra.mxu0 %v370
      %v460 = vpop.f32.mrf.mxu0
      %v461 = vadd.f32 %v268, %v460
      %v462 = vpop.f32.mrf.mxu0
      %v463 = vpop.f32.mrf.mxu0
      %v464 = vadd.f32 %v268, %v463
      %v465 = vpop.f32.mrf.mxu0
      %466 = vmatprep.mubr.bf16.mxu0 0
      %467 = vmatmul.mubr.bf16.gmra.mxu0 %v373
      %v468 = vpop.f32.mrf.mxu0
      %v469 = vadd.f32 %v268, %v468
      %v470 = vpop.f32.mrf.mxu0
      %v471 = vpop.f32.mrf.mxu0
      %v472 = vadd.f32 %v268, %v471
      %v473 = vpop.f32.mrf.mxu0
      %474 = vmatprep.mubr.bf16.mxu0 0
      %475 = vmatmul.mubr.bf16.gmra.mxu0 %v376
      %v476 = vpop.f32.mrf.mxu0
      %v477 = vadd.f32 %v268, %v476
      %v478 = vpop.f32.mrf.mxu0
      %v479 = vpop.f32.mrf.mxu0
      %v480 = vadd.f32 %v268, %v479
      %v481 = vpop.f32.mrf.mxu0
      %482 = vmatprep.mubr.bf16.mxu0 0
      %483 = vmatmul.mubr.bf16.gmra.mxu0 %v379
      %v484 = vpop.f32.mrf.mxu0
      %v485 = vadd.f32 %v268, %v484
      %v486 = vpop.f32.mrf.mxu0
      %v487 = vpop.f32.mrf.mxu0
      %v488 = vadd.f32 %v268, %v487
      %v489 = vpop.f32.mrf.mxu0
      %490 = vmatprep.mubr.bf16.mxu0 0
      %491 = vmatmul.mubr.bf16.gmra.mxu0 %v382
      %v492 = vpop.f32.mrf.mxu0
      %v493 = vadd.f32 %v268, %v492
      %v494 = vpop.f32.mrf.mxu0
      %v495 = vpop.f32.mrf.mxu0
      %v496 = vadd.f32 %v268, %v495
      %v497 = vpop.f32.mrf.mxu0
      %498 = vmatprep.mubr.bf16.mxu0 0
      %499 = vmatmul.mubr.bf16.gmra.mxu0 %v385
      %v500 = vpop.f32.mrf.mxu0
      %v501 = vadd.f32 %v268, %v500
      %v502 = vpop.f32.mrf.mxu0
      %v503 = vpop.f32.mrf.mxu0
      %v504 = vadd.f32 %v268, %v503
      %v505 = vpop.f32.mrf.mxu0
      %506 = vmatprep.mubr.bf16.mxu0 0
      %507 = vmatmul.mubr.bf16.gmra.mxu0 %v388
      %v508 = vpop.f32.mrf.mxu0
      %v509 = vadd.f32 %v268, %v508
      %v510 = vpop.f32.mrf.mxu0
      %v511 = vpop.f32.mrf.mxu0
      %v512 = vadd.f32 %v268, %v511
      %v513 = vpop.f32.mrf.mxu0
      %514 = vmatprep.mubr.bf16.mxu0 0
      %515 = vmatmul.mubr.bf16.gmra.mxu0 %v391
      %v516 = vpop.f32.mrf.mxu0
      %v517 = vadd.f32 %v268, %v516
      %v518 = vpop.f32.mrf.mxu0
      %v519 = vpop.f32.mrf.mxu0
      %v520 = vadd.f32 %v268, %v519
      %v521 = vpop.f32.mrf.mxu0
      %522 = vmatprep.mubr.bf16.mxu0 0
      %523 = vmatmul.mubr.bf16.gmra.mxu0 %v394
      %v524 = vpop.f32.mrf.mxu0
      %v525 = vadd.f32 %v268, %v524
      %v526 = vpop.f32.mrf.mxu0
      %v527 = vpop.f32.mrf.mxu0
      %v528 = vadd.f32 %v268, %v527
      %v529 = vpop.f32.mrf.mxu0
      %530 = vmatprep.mubr.bf16.mxu0 0
      %531 = vmatmul.mubr.bf16.gmra.mxu0 %v397
      %v532 = vpop.f32.mrf.mxu0
      %v533 = vadd.f32 %v268, %v532
      %v534 = vpop.f32.mrf.mxu0
      %v535 = vpop.f32.mrf.mxu0
      %v536 = vadd.f32 %v268, %v535
      %v537 = vpop.f32.mrf.mxu0
      %538 = vmatprep.mubr.bf16.mxu0 0
      %539 = vmatmul.mubr.bf16.gmra.mxu0 %v400
      %v540 = vpop.f32.mrf.mxu0
      %v541 = vadd.f32 %v268, %v540
      %v542 = vpop.f32.mrf.mxu0
      %v543 = vpop.f32.mrf.mxu0
      %v544 = vadd.f32 %v268, %v543
      %v545 = vpop.f32.mrf.mxu0
      %546 = vmatprep.mubr.bf16.mxu0 0
      %547 = vmatmul.mubr.bf16.gmra.mxu0 %v403
      %v548 = vpop.f32.mrf.mxu0
      %v549 = vadd.f32 %v268, %v548
      %v550 = vpop.f32.mrf.mxu0
      %v551 = vpop.f32.mrf.mxu0
      %v552 = vadd.f32 %v268, %v551
      %v553 = vpop.f32.mrf.mxu0
      %554 = vmatprep.mubr.bf16.mxu0 0
      %555 = vmatmul.mubr.bf16.gmra.mxu0 %v406
      %v556 = vpop.f32.mrf.mxu0
      %v557 = vadd.f32 %v268, %v556
      %v558 = vpop.f32.mrf.mxu0
      %v559 = vpop.f32.mrf.mxu0
      %v560 = vadd.f32 %v268, %v559
      %v561 = vpop.f32.mrf.mxu0
      %562 = vmatprep.mubr.bf16.mxu0 0
      %563 = vmatmul.mubr.bf16.gmra.mxu0 %v409
      %v564 = vpop.f32.mrf.mxu0
      %v565 = vadd.f32 %v268, %v564
      %v566 = vpop.f32.mrf.mxu0
      %v567 = vpop.f32.mrf.mxu0
      %v568 = vadd.f32 %v268, %v567
      %v569 = vpop.f32.mrf.mxu0
      %570 = vmatprep.mubr.bf16.mxu0 0
      %571 = vmatmul.mubr.bf16.gmra.mxu0 %v412
      %v572 = vpop.f32.mrf.mxu0
      %v573 = vadd.f32 %v268, %v572
      %v574 = vpop.f32.mrf.mxu0
      %v575 = vpop.f32.mrf.mxu0
      %v576 = vadd.f32 %v268, %v575
      %v577 = vpop.f32.mrf.mxu0
      %578 = vdwg.mxu0
      %v579 = vmax.f32 %v453, 0.0
      %v580 = vmax.f32 %v456, 0.0
      %v581 = vmax.f32 %v461, 0.0
      %v582 = vmax.f32 %v464, 0.0
      %v583 = vmax.f32 %v469, 0.0
      %v584 = vmax.f32 %v472, 0.0
      %v585 = vmax.f32 %v477, 0.0
      %v586 = vmax.f32 %v480, 0.0
      %v587 = vmax.f32 %v485, 0.0
      %v588 = vmax.f32 %v488, 0.0
      %v589 = vmax.f32 %v493, 0.0
      %v590 = vmax.f32 %v496, 0.0
      %v591 = vmax.f32 %v501, 0.0
      %v592 = vmax.f32 %v504, 0.0
      %v593 = vmax.f32 %v509, 0.0
      %v594 = vmax.f32 %v512, 0.0
      %v595 = vmax.f32 %v517, 0.0
      %v596 = vmax.f32 %v520, 0.0
      %v597 = vmax.f32 %v525, 0.0
      %v598 = vmax.f32 %v528, 0.0
      %v599 = vmax.f32 %v533, 0.0
      %v600 = vmax.f32 %v536, 0.0
      %v601 = vmax.f32 %v541, 0.0
      %v602 = vmax.f32 %v544, 0.0
      %v603 = vmax.f32 %v549, 0.0
      %v604 = vmax.f32 %v552, 0.0
      %v605 = vmax.f32 %v557, 0.0
      %v606 = vmax.f32 %v560, 0.0
      %v607 = vmax.f32 %v565, 0.0
      %v608 = vmax.f32 %v568, 0.0
      %v609 = vmax.f32 %v573, 0.0
      %v610 = vmax.f32 %v576, 0.0
      %v611 = vpack.c.bf16 %v580, %v579
      %v612 = vpack.c.bf16 %v582, %v581
      %v613 = vpack.c.bf16 %v584, %v583
      %v614 = vpack.c.bf16 %v586, %v585
      %v615 = vpack.c.bf16 %v588, %v587
      %v616 = vpack.c.bf16 %v590, %v589
      %v617 = vpack.c.bf16 %v592, %v591
      %v618 = vpack.c.bf16 %v594, %v593
      %v619 = vpack.c.bf16 %v596, %v595
      %v620 = vpack.c.bf16 %v598, %v597
      %v621 = vpack.c.bf16 %v600, %v599
      %v622 = vpack.c.bf16 %v602, %v601
      %v623 = vpack.c.bf16 %v604, %v603
      %v624 = vpack.c.bf16 %v606, %v605
      %v625 = vpack.c.bf16 %v608, %v607
      %v626 = vpack.c.bf16 %v610, %v609
      %v643 = vunpack.c.l.b16 %v611
      %v644 = vunpack.c.h.b16 %v611
      %v645 = vunpack.c.l.b16 %v612
      %v646 = vunpack.c.h.b16 %v612
      %v647 = vunpack.c.l.b16 %v613
      %v648 = vunpack.c.h.b16 %v613
      %v649 = vunpack.c.l.b16 %v614
      %v650 = vunpack.c.h.b16 %v614
      %v651 = vunpack.c.l.b16 %v615
      %v652 = vunpack.c.h.b16 %v615
      %v653 = vunpack.c.l.b16 %v616
      %v654 = vunpack.c.h.b16 %v616
      %v655 = vunpack.c.l.b16 %v617
      %v656 = vunpack.c.h.b16 %v617
      %v657 = vunpack.c.l.b16 %v618
      %v658 = vunpack.c.h.b16 %v618
      %v659 = vunpack.c.l.b16 %v619
      %v660 = vunpack.c.h.b16 %v619
      %v661 = vunpack.c.l.b16 %v620
      %v662 = vunpack.c.h.b16 %v620
      %v663 = vunpack.c.l.b16 %v621
      %v664 = vunpack.c.h.b16 %v621
      %v665 = vunpack.c.l.b16 %v622
      %v666 = vunpack.c.h.b16 %v622
      %v667 = vunpack.c.l.b16 %v623
      %v668 = vunpack.c.h.b16 %v623
      %v669 = vunpack.c.l.b16 %v624
      %v670 = vunpack.c.h.b16 %v624
      %v671 = vunpack.c.l.b16 %v625
      %v672 = vunpack.c.h.b16 %v625
      %v673 = vunpack.c.l.b16 %v626
      %v674 = vunpack.c.h.b16 %v626
      %v675 = vpack.c.b16 %v643, %v643
      %v676 = vpack.c.b16 %v644, %v644
      %v677 = vpack.c.b16 %v645, %v645
      %v678 = vpack.c.b16 %v646, %v646
      %v679 = vpack.c.b16 %v647, %v647
      %v680 = vpack.c.b16 %v648, %v648
      %v681 = vpack.c.b16 %v649, %v649
      %v682 = vpack.c.b16 %v650, %v650
      %v683 = vpack.c.b16 %v651, %v651
      %v684 = vpack.c.b16 %v652, %v652
      %v685 = vpack.c.b16 %v653, %v653
      %v686 = vpack.c.b16 %v654, %v654
      %v687 = vpack.c.b16 %v655, %v655
      %v688 = vpack.c.b16 %v656, %v656
      %v689 = vpack.c.b16 %v657, %v657
      %v690 = vpack.c.b16 %v658, %v658
      %v691 = vpack.c.b16 %v659, %v659
      %v692 = vpack.c.b16 %v660, %v660
      %v693 = vpack.c.b16 %v661, %v661
      %v694 = vpack.c.b16 %v662, %v662
      %v695 = vpack.c.b16 %v663, %v663
      %v696 = vpack.c.b16 %v664, %v664
      %v697 = vpack.c.b16 %v665, %v665
      %v698 = vpack.c.b16 %v666, %v666
      %v699 = vpack.c.b16 %v667, %v667
      %v700 = vpack.c.b16 %v668, %v668
      %v701 = vpack.c.b16 %v669, %v669
      %v702 = vpack.c.b16 %v670, %v670
      %v703 = vpack.c.b16 %v671, %v671
      %v704 = vpack.c.b16 %v672, %v672
      %v705 = vpack.c.b16 %v673, %v673
      %v706 = vpack.c.b16 %v674, %v674
      %739 = vst [vmem:[%s223] sm:$0xf] %v675
      %740 = vst [vmem:[%s223 + $0x4] sm:$0xf] %v676
      %741 = vst [vmem:[%s223 + $0x8] sm:$0xf] %v677
      %742 = vst [vmem:[%s223 + $0xc] sm:$0xf] %v678
      %743 = vst [vmem:[%s223 + $0x10] sm:$0xf] %v679
      %744 = vst [vmem:[%s223 + $0x14] sm:$0xf] %v680
      %745 = vst [vmem:[%s223 + $0x18] sm:$0xf] %v681
      %746 = vst [vmem:[%s223 + $0x1c] sm:$0xf] %v682
      %747 = vst [vmem:[%s223 + $0x20] sm:$0xf] %v683
      %748 = vst [vmem:[%s223 + $0x24] sm:$0xf] %v684
      %749 = vst [vmem:[%s223 + $0x28] sm:$0xf] %v685
      %750 = vst [vmem:[%s223 + $0x2c] sm:$0xf] %v686
      %751 = vst [vmem:[%s223 + $0x30] sm:$0xf] %v687
      %752 = vst [vmem:[%s223 + $0x34] sm:$0xf] %v688
      %753 = vst [vmem:[%s223 + $0x38] sm:$0xf] %v689
      %754 = vst [vmem:[%s223 + $0x3c] sm:$0xf] %v690
      %755 = vst [vmem:[%s223 + $0x40] sm:$0xf] %v691
      %756 = vst [vmem:[%s223 + $0x44] sm:$0xf] %v692
      %757 = vst [vmem:[%s223 + $0x48] sm:$0xf] %v693
      %758 = vst [vmem:[%s223 + $0x4c] sm:$0xf] %v694
      %759 = vst [vmem:[%s223 + $0x50] sm:$0xf] %v695
      %760 = vst [vmem:[%s223 + $0x54] sm:$0xf] %v696
      %761 = vst [vmem:[%s223 + $0x58] sm:$0xf] %v697
      %762 = vst [vmem:[%s223 + $0x5c] sm:$0xf] %v698
      %763 = vst [vmem:[%s223 + $0x60] sm:$0xf] %v699
      %764 = vst [vmem:[%s223 + $0x64] sm:$0xf] %v700
      %765 = vst [vmem:[%s223 + $0x68] sm:$0xf] %v701
      %766 = vst [vmem:[%s223 + $0x6c] sm:$0xf] %v702
      %767 = vst [vmem:[%s223 + $0x70] sm:$0xf] %v703
      %768 = vst [vmem:[%s223 + $0x74] sm:$0xf] %v704
      %769 = vst [vmem:[%s223 + $0x78] sm:$0xf] %v705
      %770 = vst [vmem:[%s223 + $0x7c] sm:$0xf] %v706
      %s771 = smul.u32 32, %s18
      %p772 = scmp.lt.s32.totalorder %s771, 63
      %s773 = scalar_select %p772, %s771, 63
      %p774 = scmp.lt.s32.totalorder %s19, 0
      %s775 = scalar_select %p774, %s19, 0
      %s776 = sadd.s32 %s775, %s773
      %s777 = smul.addr %s776, 4
      %s778 = scalar_lea.vmem %s3, %s777
      // Predicated region
      $region33: #{wide_basic_block_forward.2} parent=31 // pred_check
        %p779 = pneg %p124
      $region34: #{wide_basic_block_forward.2} parent=31 // pred_check_branch
        %781 = sbr.rel (%p779) target = $region36
      $region35: #{wide_basic_block_forward.2} parent=31 // pred_region
        %s782 = smul.u32 32, %s18
      $region36: #{wide_basic_block_forward.2} parent=31 // pred_fallthru
        _
    $region32: #{wide_basic_block_forward.2} parent=5 // pred_fallthru
      _
    %p783 = scmp.le.s32.totalorder 2, %s9
    // Predicated region
    $region37: #{wide_basic_block_forward.2} parent=5 // pred_check
      %p784 = pneg %p783
    $region38: #{wide_basic_block_forward.2} parent=5 // pred_check_branch
      %786 = sbr.rel (%p784) target = $region40
    $region39: #{wide_basic_block_forward.2} parent=5 // pred_region
      %s787 = ssub.s32 %s9, 2
      // Predicated region
      $region41: #{wide_basic_block_forward.2} parent=39 // pred_check
        %p788 = pneg %p130
      $region42: #{wide_basic_block_forward.2} parent=39 // pred_check_branch
        %790 = sbr.rel (%p788) target = $region44
      $region43: #{wide_basic_block_forward.2} parent=39 // pred_region
        %s791 = smul.u32 32, %s20
        %p792 = scmp.lt.s32.totalorder %s791, 63
        %s793 = scalar_select %p792, %s791, 63
        %p794 = scmp.lt.s32.totalorder %s21, 0
        %s795 = scalar_select %p794, %s21, 0
        %s796 = sadd.s32 %s795, %s793
        %s797 = smul.addr %s796, 4
        %s798 = scalar_lea.vmem %s3, %s797
      $region44: #{wide_basic_block_forward.2} parent=39 // pred_fallthru
        _
    $region40: #{wide_basic_block_forward.2} parent=5 // pred_fallthru
      _
  $region6: #{wide_basic_block_forward.2} parent=0 // loop_footer
    %s13 = sadd.s32 1, %s9
  $region7: #{wide_basic_block_forward.2} parent=0 // loop_footer_branch
    %8 = sbr.rel target = $region3
  $region8: #{wide_basic_block_forward.2} parent=0 // loop_exit
    _

// kernel: wide_basic_block_forward.3
$region0: #{wide_basic_block_forward.3}
  #allocation0 [shape = 'u32[]', space=smem, size = 0x4, offset = 0x4, fixed_abs, tag = 'smem constant byte address 0x4 - core index']
  #allocation1 [shape = 'u32[144,128]{1,0:T(1,128)}', space=vmem, size = 0x12000, scoped, tag = 'internal scratch']
  %s0 = inlined_call_operand.vmem [shape: bf16[512,144], index: 0, kind: input, shape index: {}]
  %s1 = inlined_call_operand.vmem [shape: bf16[144,128], index: 1, kind: input, shape index: {}]
  %s2 = inlined_call_operand.vmem [shape: f32[1,128], index: 2, kind: input, shape index: {}]
  %s3 = inlined_call_operand.vmem [shape: bf16[512,8], index: 3, kind: input, shape index: {}]
  %s4 = inlined_call_operand.vmem [shape: bf16[8,128], index: 4, kind: input, shape index: {}]
  %s5 = inlined_call_operand.vmem [shape: f32[1,128], index: 5, kind: input, shape index: {}]
  %s6 = inlined_call_operand.vmem [shape: f32[512,128], index: 6, kind: output, shape index: {}]
  %s7 = sld [smem:[#allocation0]]
  $region57: #{wide_basic_block_forward.3} parent=0
    _
  %s9 = ssub.s32 1, %s7
  %s10 = scalar_select 0, %s9, %s7
  loop: start=0, step=1, limit=4
  $region2: #{wide_basic_block_forward.3} parent=0 // loop_pre_header
    _
  $region3: #{wide_basic_block_forward.3} parent=0 // loop_header
    %s12 = sphi 0, %s16
    %p13 = scmp.ge.s32.totalorder %s12, 4
    %s19 = sphi 0, %s31
    %s20 = sphi 0, %s27
    %s21 = sphi 0, %s19
    %s22 = sphi 0, %s20
    %s23 = sphi 0, %s21
    %s24 = sphi 0, %s22
    %s34 = sphi 0, %s36
    %s37 = sphi 0, %s34
    %s38 = sphi 0, %s37
    %s54 = sphi 0, %s38
    %s60 = sphi 0, %s62
    %s63 = sphi 0, %s60
    %s64 = sphi 0, %s63
    %s80 = sphi 0, %s64
    %s86 = sphi 0, %s88
    %s89 = sphi 0, %s86
    %s90 = sphi 0, %s89
    %s106 = sphi 0, %s90
    %s112 = sphi 0, %s114
    %s115 = sphi 0, %s112
    %s116 = sphi 0, %s115
    %s132 = sphi 0, %s116
    %s138 = sphi 0, %s140
    %s141 = sphi 0, %s138
    %s142 = sphi 0, %s141
    %s158 = sphi 0, %s142
    %s164 = sphi 0, %s166
    %s167 = sphi 0, %s164
    %s168 = sphi 0, %s167
    %s184 = sphi 0, %s168
    %s192 = sphi 0, %s194
    %s195 = sphi 0, %s192
    %s196 = sphi 0, %s195
    %s212 = sphi 0, %s196
  $region4: #{wide_basic_block_forward.3} parent=0 // loop_header_branch
    %15 = sbr.rel (%p13) target = $region8
  $region5: #{wide_basic_block_forward.3} parent=0 // loop_body
    %s17 = ssub.s32 %s12, 1
    %s18 = ssub.s32 %s12, 2
    %s25 = sadd.s32 1, %s20
    %p26 = scmp.ge.s32.totalorder %s25, 1
    %s27 = scalar_select %p26, 0, %s25
    %s28 = sadd.s32 1, %s19
    %s29 = scalar_select %p26, %s28, %s19
    %p30 = scmp.ge.s32.totalorder %s29, 2
    %s31 = scalar_select %p30, 0, %s29
    %s32 = ssub.s32 %s19, %s31
    %p33 = scmp.eq.s32.totalorder %s32, 0
    %s35 = sadd.s32 %s34, 1
    %s36 = scalar_select %p33, %s34, %s35
    %p39 = pneg %p33
    %p40 = scmp.eq.s32.totalorder %s12, 1
    %p41 = por %p39, %p40
    %p42 = scmp.ne.s32.totalorder %s34, %s37
    %p43 = scmp.eq.s32.totalorder %s12, 0
    %p44 = por %p42, %p43
    %p45 = scmp.ne.s32.totalorder %s34, %s37
    %p46 = scmp.eq.s32.totalorder %s17, 1
    %p47 = por %p45, %p46
    %p48 = scmp.ne.s32.totalorder %s37, %s38
    %p49 = scmp.eq.s32.totalorder %s17, 0
    %p50 = por %p48, %p49
    %p51 = scmp.ne.s32.totalorder %s37, %s38
    %p52 = scmp.eq.s32.totalorder %s18, 1
    %p53 = por %p51, %p52
    %p55 = scmp.ne.s32.totalorder %s38, %s54
    %p56 = scmp.eq.s32.totalorder %s18, 0
    %p57 = por %p55, %p56
    %s58 = ssub.s32 %s20, %s27
    %p59 = scmp.eq.s32.totalorder %s58, 0
    %s61 = sadd.s32 %s60, 1
    %s62 = scalar_select %p59, %s60, %s61
    %p65 = pneg %p59
    %p66 = scmp.eq.s32.totalorder %s12, 1
    %p67 = por %p65, %p66
    %p68 = scmp.ne.s32.totalorder %s60, %s63
    %p69 = scmp.eq.s32.totalorder %s12, 0
    %p70 = por %p68, %p69
    %p71 = scmp.ne.s32.totalorder %s60, %s63
    %p72 = scmp.eq.s32.totalorder %s17, 1
    %p73 = por %p71, %p72
    %p74 = scmp.ne.s32.totalorder %s63, %s64
    %p75 = scmp.eq.s32.totalorder %s17, 0
    %p76 = por %p74, %p75
    %p77 = scmp.ne.s32.totalorder %s63, %s64
    %p78 = scmp.eq.s32.totalorder %s18, 1
    %p79 = por %p77, %p78
    %p81 = scmp.ne.s32.totalorder %s64, %s80
    %p82 = scmp.eq.s32.totalorder %s18, 0
    %p83 = por %p81, %p82
    %s84 = ssub.s32 %s20, %s27
    %p85 = scmp.eq.s32.totalorder %s84, 0
    %s87 = sadd.s32 %s86, 1
    %s88 = scalar_select %p85, %s86, %s87
    %p91 = pneg %p85
    %p92 = scmp.eq.s32.totalorder %s12, 1
    %p93 = por %p91, %p92
    %p94 = scmp.ne.s32.totalorder %s86, %s89
    %p95 = scmp.eq.s32.totalorder %s12, 0
    %p96 = por %p94, %p95
    %p97 = scmp.ne.s32.totalorder %s86, %s89
    %p98 = scmp.eq.s32.totalorder %s17, 1
    %p99 = por %p97, %p98
    %p100 = scmp.ne.s32.totalorder %s89, %s90
    %p101 = scmp.eq.s32.totalorder %s17, 0
    %p102 = por %p100, %p101
    %p103 = scmp.ne.s32.totalorder %s89, %s90
    %p104 = scmp.eq.s32.totalorder %s18, 1
    %p105 = por %p103, %p104
    %p107 = scmp.ne.s32.totalorder %s90, %s106
    %p108 = scmp.eq.s32.totalorder %s18, 0
    %p109 = por %p107, %p108
    %s110 = ssub.s32 %s19, %s31
    %p111 = scmp.eq.s32.totalorder %s110, 0
    %s113 = sadd.s32 %s112, 1
    %s114 = scalar_select %p111, %s112, %s113
    %p117 = pneg %p111
    %p118 = scmp.eq.s32.totalorder %s12, 1
    %p119 = por %p117, %p118
    %p120 = scmp.ne.s32.totalorder %s112, %s115
    %p121 = scmp.eq.s32.totalorder %s12, 0
    %p122 = por %p120, %p121
    %p123 = scmp.ne.s32.totalorder %s112, %s115
    %p124 = scmp.eq.s32.totalorder %s17, 1
    %p125 = por %p123, %p124
    %p126 = scmp.ne.s32.totalorder %s115, %s116
    %p127 = scmp.eq.s32.totalorder %s17, 0
    %p128 = por %p126, %p127
    %p129 = scmp.ne.s32.totalorder %s115, %s116
    %p130 = scmp.eq.s32.totalorder %s18, 1
    %p131 = por %p129, %p130
    %p133 = scmp.ne.s32.totalorder %s116, %s132
    %p134 = scmp.eq.s32.totalorder %s18, 0
    %p135 = por %p133, %p134
    %s136 = ssub.s32 %s20, %s27
    %p137 = scmp.eq.s32.totalorder %s136, 0
    %s139 = sadd.s32 %s138, 1
    %s140 = scalar_select %p137, %s138, %s139
    %p143 = pneg %p137
    %p144 = scmp.eq.s32.totalorder %s12, 1
    %p145 = por %p143, %p144
    %p146 = scmp.ne.s32.totalorder %s138, %s141
    %p147 = scmp.eq.s32.totalorder %s12, 0
    %p148 = por %p146, %p147
    %p149 = scmp.ne.s32.totalorder %s138, %s141
    %p150 = scmp.eq.s32.totalorder %s17, 1
    %p151 = por %p149, %p150
    %p152 = scmp.ne.s32.totalorder %s141, %s142
    %p153 = scmp.eq.s32.totalorder %s17, 0
    %p154 = por %p152, %p153
    %p155 = scmp.ne.s32.totalorder %s141, %s142
    %p156 = scmp.eq.s32.totalorder %s18, 1
    %p157 = por %p155, %p156
    %p159 = scmp.ne.s32.totalorder %s142, %s158
    %p160 = scmp.eq.s32.totalorder %s18, 0
    %p161 = por %p159, %p160
    %s162 = ssub.s32 %s20, %s27
    %p163 = scmp.eq.s32.totalorder %s162, 0
    %s165 = sadd.s32 %s164, 1
    %s166 = scalar_select %p163, %s164, %s165
    %p169 = pneg %p163
    %p170 = scmp.eq.s32.totalorder %s12, 1
    %p171 = por %p169, %p170
    %p172 = scmp.ne.s32.totalorder %s164, %s167
    %p173 = scmp.eq.s32.totalorder %s12, 0
    %p174 = por %p172, %p173
    %p175 = scmp.ne.s32.totalorder %s164, %s167
    %p176 = scmp.eq.s32.totalorder %s17, 1
    %p177 = por %p175, %p176
    %p178 = scmp.ne.s32.totalorder %s167, %s168
    %p179 = scmp.eq.s32.totalorder %s17, 0
    %p180 = por %p178, %p179
    %p181 = scmp.ne.s32.totalorder %s167, %s168
    %p182 = scmp.eq.s32.totalorder %s18, 1
    %p183 = por %p181, %p182
    %p185 = scmp.ne.s32.totalorder %s168, %s184
    %p186 = scmp.eq.s32.totalorder %s18, 0
    %p187 = por %p185, %p186
    %s188 = ssub.s32 %s19, %s31
    %s189 = ssub.s32 %s20, %s27
    %s190 = sor.u32 %s188, %s189
    %p191 = scmp.eq.s32.totalorder %s190, 0
    %s193 = sadd.s32 %s192, 1
    %s194 = scalar_select %p191, %s192, %s193
    %p197 = pneg %p191
    %p198 = scmp.eq.s32.totalorder %s12, 1
    %p199 = por %p197, %p198
    %p200 = scmp.ne.s32.totalorder %s192, %s195
    %p201 = scmp.eq.s32.totalorder %s12, 0
    %p202 = por %p200, %p201
    %p203 = scmp.ne.s32.totalorder %s192, %s195
    %p204 = scmp.eq.s32.totalorder %s17, 1
    %p205 = por %p203, %p204
    %p206 = scmp.ne.s32.totalorder %s195, %s196
    %p207 = scmp.eq.s32.totalorder %s17, 0
    %p208 = por %p206, %p207
    %p209 = scmp.ne.s32.totalorder %s195, %s196
    %p210 = scmp.eq.s32.totalorder %s18, 1
    %p211 = por %p209, %p210
    %p213 = scmp.ne.s32.totalorder %s196, %s212
    %p214 = scmp.eq.s32.totalorder %s18, 0
    %p215 = por %p213, %p214
    %p216 = scmp.le.s32.totalorder 1, %s12
    %p217 = scmp.lt.s32.totalorder %s12, 3
    %p218 = pnand %p216, %p217
    %p219 = pneg %p218
    // Predicated region
    $region9: #{wide_basic_block_forward.3} parent=5 // pred_check
      _
    $region10: #{wide_basic_block_forward.3} parent=5 // pred_check_branch
      %221 = sbr.rel (%p218) target = $region12
    $region11: #{wide_basic_block_forward.3} parent=5 // pred_region
      %s222 = ssub.s32 %s12, 1
      // Predicated region
      $region13: #{wide_basic_block_forward.3} parent=11 // pred_check
        %p223 = pneg %p76
      $region14: #{wide_basic_block_forward.3} parent=11 // pred_check_branch
        %225 = sbr.rel (%p223) target = $region16
      $region15: #{wide_basic_block_forward.3} parent=11 // pred_region
        %p226 = scmp.lt.s32.totalorder %s22, 0
        %s227 = scalar_select %p226, %s22, 0
        %s228 = smul.addr %s227, 4
        %s229 = scalar_lea.vmem %s1, %s228
      $region16: #{wide_basic_block_forward.3} parent=11 // pred_fallthru
        _
      // Predicated region
      $region17: #{wide_basic_block_forward.3} parent=11 // pred_check
        %p230 = pneg %p102
      $region18: #{wide_basic_block_forward.3} parent=11 // pred_check_branch
        %232 = sbr.rel (%p230) target = $region20
      $region19: #{wide_basic_block_forward.3} parent=11 // pred_region
        %p233 = scmp.lt.s32.totalorder %s22, 0
        %s234 = scalar_select %p233, %s22, 0
        %s235 = scalar_lea.vmem %s2, %s234
      $region20: #{wide_basic_block_forward.3} parent=11 // pred_fallthru
        _
      // Predicated region
      $region21: #{wide_basic_block_forward.3} parent=11 // pred_check
        %p236 = pneg %p154
      $region22: #{wide_basic_block_forward.3} parent=11 // pred_check_branch
        %238 = sbr.rel (%p236) target = $region24
      $region23: #{wide_basic_block_forward.3} parent=11 // pred_region
        %p239 = scmp.lt.s32.totalorder %s22, 0
        %s240 = scalar_select %p239, %s22, 0
        %s241 = smul.addr %s240, 4
        %s242 = scalar_lea.vmem %s4, %s241
      $region24: #{wide_basic_block_forward.3} parent=11 // pred_fallthru
        _
      // Predicated region
      $region25: #{wide_basic_block_forward.3} parent=11 // pred_check
        %p243 = pneg %p180
      $region26: #{wide_basic_block_forward.3} parent=11 // pred_check_branch
        %245 = sbr.rel (%p243) target = $region28
      $region27: #{wide_basic_block_forward.3} parent=11 // pred_region
        %p246 = scmp.lt.s32.totalorder %s22, 0
        %s247 = scalar_select %p246, %s22, 0
        %s248 = scalar_lea.vmem %s5, %s247
      $region28: #{wide_basic_block_forward.3} parent=11 // pred_fallthru
        _
    $region12: #{wide_basic_block_forward.3} parent=5 // pred_fallthru
      _
    %p249 = scmp.lt.s32.totalorder %s12, 2
    // Predicated region
    $region29: #{wide_basic_block_forward.3} parent=5 // pred_check
      %p250 = pneg %p249
    $region30: #{wide_basic_block_forward.3} parent=5 // pred_check_branch
      %252 = sbr.rel (%p250) target = $region32
    $region31: #{wide_basic_block_forward.3} parent=5 // pred_region
      // Predicated region
      $region33: #{wide_basic_block_forward.3} parent=31 // pred_check
        %p253 = pneg %p44
      $region34: #{wide_basic_block_forward.3} parent=31 // pred_check_branch
        %255 = sbr.rel (%p253) target = $region36
      $region35: #{wide_basic_block_forward.3} parent=31 // pred_region
        %s256 = smul.u32 32, %s19
        %p257 = scmp.lt.s32.totalorder %s256, 63
        %s258 = scalar_select %p257, %s256, 63
        %s259 = smul.addr %s258, 2
        %s260 = smul.addr %s259, 4
        %s261 = scalar_lea.vmem %s0, %s260
        %s262 = smul.u32 32, %s19
      $region36: #{wide_basic_block_forward.3} parent=31 // pred_fallthru
        _
      // Predicated region
      $region37: #{wide_basic_block_forward.3} parent=31 // pred_check
        %p263 = pneg %p122
      $region38: #{wide_basic_block_forward.3} parent=31 // pred_check_branch
        %265 = sbr.rel (%p263) target = $region40
      $region39: #{wide_basic_block_forward.3} parent=31 // pred_region
        %s266 = smul.u32 32, %s19
        %p267 = scmp.lt.s32.totalorder %s266, 63
        %s268 = scalar_select %p267, %s266, 63
        %s269 = smul.addr %s268, 4
        %s270 = scalar_lea.vmem %s3, %s269
        %s271 = smul.u32 32, %s19
      $region40: #{wide_basic_block_forward.3} parent=31 // pred_fallthru
        _
    $region32: #{wide_basic_block_forward.3} parent=5 // pred_fallthru
      _
    %p272 = scmp.le.s32.totalorder 1, %s12
    %p273 = scmp.lt.s32.totalorder %s12, 3
    %p274 = pnand %p272, %p273
    %p275 = pneg %p274
    // Predicated region
    $region41: #{wide_basic_block_forward.3} parent=5 // pred_check
      _
    $region42: #{wide_basic_block_forward.3} parent=5 // pred_check_branch
      %277 = sbr.rel (%p274) target = $region44
    $region43: #{wide_basic_block_forward.3} parent=5 // pred_region
      %s278 = ssub.s32 %s12, 1
      %s279 = smul.u32 32, %s21
      %p280 = scmp.lt.s32.totalorder %s279, 63
      %s281 = scalar_select %p280, %s279, 63
      %s282 = smul.addr %s281, 2
      %s283 = smul.addr %s282, 4
      %s284 = scalar_lea.vmem %s0, %s283
      %p285 = pneg %p50
      %p286 = pneg %p47
      %p287 = scmp.lt.s32.totalorder %s22, 0
      %s288 = scalar_select %p287, %s22, 0
      %s289 = smul.addr %s288, 4
      %s290 = scalar_lea.vmem %s1, %s289
      %p291 = pneg %p76
      %p292 = pneg %p73
      %p293 = scmp.lt.s32.totalorder %s22, 0
      %s294 = scalar_select %p293, %s22, 0
      %s295 = scalar_lea.vmem %s2, %s294
      %p296 = pneg %p102
      %p297 = pneg %p99
      %s298 = smul.u32 32, %s21
      %p299 = scmp.lt.s32.totalorder %s298, 63
      %s300 = scalar_select %p299, %s298, 63
      %s301 = smul.addr %s300, 4
      %s302 = scalar_lea.vmem %s3, %s301
      %p303 = pneg %p128
      %p304 = pneg %p125
      %p305 = scmp.lt.s32.totalorder %s22, 0
      %s306 = scalar_select %p305, %s22, 0
      %s307 = smul.addr %s306, 4
      %s308 = scalar_lea.vmem %s4, %s307
      %p309 = pneg %p154
      %p310 = pneg %p151
      %p311 = scmp.lt.s32.totalorder %s22, 0
      %s312 = scalar_select %p311, %s22, 0
      %s313 = scalar_lea.vmem %s5, %s312
      %p314 = pneg %p180
      %p315 = pneg %p177
      %p316 = pneg %p208
      %p317 = pneg %p205
      %s318 = smul.u32 32, %s21
      %p319 = scmp.lt.s32.totalorder %s318, 63
      %s320 = scalar_select %p319, %s318, 63
      %p321 = scmp.lt.s32.totalorder %s22, 0
      %s322 = scalar_select %p321, %s22, 0
      %s323 = sadd.s32 %s322, %s320
      %s324 = smul.addr %s323, 8
      %s325 = scalar_lea.vmem %s6, %s324
      %s326 = smul.u32 32, %s21
      %p327 = scmp.lt.s32.totalorder %s326, 63
      %s328 = scalar_select %p327, %s326, 63
      %s329 = smul.addr %s328, 2
      %s330 = smul.addr %s329, 4
      %s331 = scalar_lea.vmem %s0, %s330
      %s332 = smul.u32 32, %s21
      %p333 = scmp.lt.s32.totalorder %s22, 0
      %s334 = scalar_select %p333, %s22, 0
      %s335 = smul.addr %s334, 4
      %s336 = scalar_lea.vmem %s1, %s335
      %p337 = scmp.lt.s32.totalorder %s22, 0
      %s338 = scalar_select %p337, %s22, 0
      %s339 = scalar_lea.vmem %s2, %s338
      %s340 = smul.u32 32, %s21
      %p341 = scmp.lt.s32.totalorder %s340, 63
      %s342 = scalar_select %p341, %s340, 63
      %s343 = smul.addr %s342, 4
      %s344 = scalar_lea.vmem %s3, %s343
      %s345 = smul.u32 32, %s21
      %p346 = scmp.lt.s32.totalorder %s22, 0
      %s347 = scalar_select %p346, %s22, 0
      %s348 = smul.addr %s347, 4
      %s349 = scalar_lea.vmem %s4, %s348
      %p350 = scmp.lt.s32.totalorder %s22, 0
      %s351 = scalar_select %p350, %s22, 0
      %s352 = scalar_lea.vmem %s5, %s351
      %s353 = smul.u32 32, %s21
      %p354 = scmp.lt.s32.totalorder %s353, 63
      %s355 = scalar_select %p354, %s353, 63
      %p356 = scmp.lt.s32.totalorder %s22, 0
      %s357 = scalar_select %p356, %s22, 0
      %s358 = sadd.s32 %s357, %s355
      %s359 = smul.addr %s358, 8
      %s360 = scalar_lea.vmem %s6, %s359
      %s361 = smul.u32 32, %s21
      %v363 = vld [vmem:[%s331] sm:$0xff]
      %v364 = vld [vmem:[%s331 + $0x8] sm:$0xff]
      %v365 = vld [vmem:[%s331 + $0x10] sm:$0xff]
      %v366 = vld [vmem:[%s331 + $0x18] sm:$0xff]
      %v367 = vld [vmem:[%s331 + $0x20] sm:$0xff]
      %v368 = vld [vmem:[%s331 + $0x28] sm:$0xff]
      %v369 = vld [vmem:[%s331 + $0x30] sm:$0xff]
      %v370 = vld [vmem:[%s331 + $0x38] sm:$0xff]
      %v371 = vld [vmem:[%s331 + $0x40] sm:$0xff]
      %v372 = vld [vmem:[%s331 + $0x48] sm:$0xff]
      %v373 = vld [vmem:[%s331 + $0x50] sm:$0xff]
      %v374 = vld [vmem:[%s331 + $0x58] sm:$0xff]
      %v375 = vld [vmem:[%s331 + $0x60] sm:$0xff]
      %v376 = vld [vmem:[%s331 + $0x68] sm:$0xff]
      %v377 = vld [vmem:[%s331 + $0x70] sm:$0xff]
      %v378 = vld [vmem:[%s331 + $0x78] sm:$0xff]
      %v379 = vld [vmem:[%s331 + $0x80] sm:$0xff]
      %v380 = vld [vmem:[%s331 + $0x88] sm:$0xff]
      %v381 = vld [vmem:[%s331 + $0x90] sm:$0xff]
      %v382 = vld [vmem:[%s331 + $0x98] sm:$0xff]
      %v383 = vld [vmem:[%s331 + $0xa0] sm:$0xff]
      %v384 = vld [vmem:[%s331 + $0xa8] sm:$0xff]
      %v385 = vld [vmem:[%s331 + $0xb0] sm:$0xff]
      %v386 = vld [vmem:[%s331 + $0xb8] sm:$0xff]
      %v387 = vld [vmem:[%s331 + $0xc0] sm:$0xff]
      %v388 = vld [vmem:[%s331 + $0xc8] sm:$0xff]
      %v389 = vld [vmem:[%s331 + $0xd0] sm:$0xff]
      %v390 = vld [vmem:[%s331 + $0xd8] sm:$0xff]
      %v391 = vld [vmem:[%s331 + $0xe0] sm:$0xff]
      %v392 = vld [vmem:[%s331 + $0xe8] sm:$0xff]
      %v393 = vld [vmem:[%s331 + $0xf0] sm:$0xff]
      %v394 = vld [vmem:[%s331 + $0xf8] sm:$0xff]
      %v395 = vld [vmem:[%s336] sm:$0xf]
      %v396 = vld [vmem:[%s336 + $0x4] sm:$0xf]
      %v397 = vld [vmem:[%s336 + $0x8] sm:$0xf]
      %v398 = vld [vmem:[%s336 + $0xc] sm:$0xf]
      %v399 = vld [vmem:[%s336 + $0x10] sm:$0xf]
      %v400 = vld [vmem:[%s336 + $0x14] sm:$0xf]
      %v401 = vld [vmem:[%s336 + $0x18] sm:$0xf]
      %v402 = vld [vmem:[%s336 + $0x1c] sm:$0xf]
      %v403 = vld [vmem:[%s336 + $0x20] sm:$0xf]
      %v404 = vld [vmem:[%s336 + $0x24] sm:$0xf]
      %v405 = vld [vmem:[%s336 + $0x28] sm:$0xf]
      %v406 = vld [vmem:[%s336 + $0x2c] sm:$0xf]
      %v407 = vld [vmem:[%s336 + $0x30] sm:$0xf]
      %v408 = vld [vmem:[%s336 + $0x34] sm:$0xf]
      %v409 = vld [vmem:[%s336 + $0x38] sm:$0xf]
      %v410 = vld [vmem:[%s336 + $0x3c] sm:$0xf]
      %v411 = vld [vmem:[%s336 + $0x40] sm:$0xf]
      %v412 = vld [vmem:[%s336 + $0x44] sm:$0xf]
      %v413 = vld [vmem:[%s339] sm:$0x1]
      %v415 = vlaneseq
      %v416 = vshrl.u32 %v415, 7
      %v417 = vsub.s32 0, %v416
      %v418 = vrot.slane %v413, %v417
      %v452 = vunpack.c.l.b16 %v363
      %v453 = vunpack.c.h.b16 %v363
      %v454 = vunpack.c.l.b16 %v364
      %v455 = vunpack.c.h.b16 %v364
      %v456 = vunpack.c.l.b16 %v365
      %v457 = vunpack.c.h.b16 %v365
      %v458 = vunpack.c.l.b16 %v366
      %v459 = vunpack.c.h.b16 %v366
      %v460 = vunpack.c.l.b16 %v367
      %v461 = vunpack.c.h.b16 %v367
      %v462 = vunpack.c.l.b16 %v368
      %v463 = vunpack.c.h.b16 %v368
      %v464 = vunpack.c.l.b16 %v369
      %v465 = vunpack.c.h.b16 %v369
      %v466 = vunpack.c.l.b16 %v370
      %v467 = vunpack.c.h.b16 %v370
      %v468 = vunpack.c.l.b16 %v371
      %v469 = vunpack.c.h.b16 %v371
      %v470 = vunpack.c.l.b16 %v372
      %v471 = vunpack.c.h.b16 %v372
      %v472 = vunpack.c.l.b16 %v373
      %v473 = vunpack.c.h.b16 %v373
      %v474 = vunpack.c.l.b16 %v374
      %v475 = vunpack.c.h.b16 %v374
      %v476 = vunpack.c.l.b16 %v375
      %v477 = vunpack.c.h.b16 %v375
      %v478 = vunpack.c.l.b16 %v376
      %v479 = vunpack.c.h.b16 %v376
      %v480 = vunpack.c.l.b16 %v377
      %v481 = vunpack.c.h.b16 %v377
      %v482 = vunpack.c.l.b16 %v378
      %v483 = vunpack.c.h.b16 %v378
      %v484 = vunpack.c.l.b16 %v379
      %v485 = vunpack.c.h.b16 %v379
      %v486 = vunpack.c.l.b16 %v380
      %v487 = vunpack.c.h.b16 %v380
      %v488 = vunpack.c.l.b16 %v381
      %v489 = vunpack.c.h.b16 %v381
      %v490 = vunpack.c.l.b16 %v382
      %v491 = vunpack.c.h.b16 %v382
      %v492 = vunpack.c.l.b16 %v383
      %v493 = vunpack.c.h.b16 %v383
      %v494 = vunpack.c.l.b16 %v384
      %v495 = vunpack.c.h.b16 %v384
      %v496 = vunpack.c.l.b16 %v385
      %v497 = vunpack.c.h.b16 %v385
      %v498 = vunpack.c.l.b16 %v386
      %v499 = vunpack.c.h.b16 %v386
      %v500 = vunpack.c.l.b16 %v387
      %v501 = vunpack.c.h.b16 %v387
      %v502 = vunpack.c.l.b16 %v388
      %v503 = vunpack.c.h.b16 %v388
      %v504 = vunpack.c.l.b16 %v389
      %v505 = vunpack.c.h.b16 %v389
      %v506 = vunpack.c.l.b16 %v390
      %v507 = vunpack.c.h.b16 %v390
      %v508 = vunpack.c.l.b16 %v391
      %v509 = vunpack.c.h.b16 %v391
      %v510 = vunpack.c.l.b16 %v392
      %v511 = vunpack.c.h.b16 %v392
      %v512 = vunpack.c.l.b16 %v393
      %v513 = vunpack.c.h.b16 %v393
      %v514 = vunpack.c.l.b16 %v394
      %v515 = vunpack.c.h.b16 %v394
      %v516 = vpack.c.b16 %v454, %v452
      %v517 = vpack.c.b16 %v455, %v453
      %v518 = vpack.c.b16 %v458, %v456
      %v519 = vpack.c.b16 %v459, %v457
      %v520 = vpack.c.b16 %v462, %v460
      %v521 = vpack.c.b16 %v463, %v461
      %v522 = vpack.c.b16 %v466, %v464
      %v523 = vpack.c.b16 %v467, %v465
      %v524 = vpack.c.b16 %v470, %v468
      %v525 = vpack.c.b16 %v471, %v469
      %v526 = vpack.c.b16 %v474, %v472
      %v527 = vpack.c.b16 %v475, %v473
      %v528 = vpack.c.b16 %v478, %v476
      %v529 = vpack.c.b16 %v479, %v477
      %v530 = vpack.c.b16 %v482, %v480
      %v531 = vpack.c.b16 %v483, %v481
      %v532 = vpack.c.b16 %v486, %v484
      %v533 = vpack.c.b16 %v487, %v485
      %v534 = vpack.c.b16 %v490, %v488
      %v535 = vpack.c.b16 %v491, %v489
      %v536 = vpack.c.b16 %v494, %v492
      %v537 = vpack.c.b16 %v495, %v493
      %v538 = vpack.c.b16 %v498, %v496
      %v539 = vpack.c.b16 %v499, %v497
      %v540 = vpack.c.b16 %v502, %v500
      %v541 = vpack.c.b16 %v503, %v501
      %v542 = vpack.c.b16 %v506, %v504
      %v543 = vpack.c.b16 %v507, %v505
      %v544 = vpack.c.b16 %v510, %v508
      %v545 = vpack.c.b16 %v511, %v509
      %v546 = vpack.c.b16 %v514, %v512
      %v547 = vpack.c.b16 %v515, %v513
      %v582 = vunpack.c.l.b16 %v395
      %v583 = vunpack.c.l.b16 %v396
      %v584 = vunpack.c.l.b16 %v397
      %v585 = vunpack.c.l.b16 %v398
      %v586 = vunpack.c.l.b16 %v399
      %v587 = vunpack.c.l.b16 %v400
      %v588 = vunpack.c.l.b16 %v401
      %v589 = vunpack.c.l.b16 %v402
      %v590 = vunpack.c.l.b16 %v403
      %v591 = vunpack.c.l.b16 %v404
      %v592 = vunpack.c.l.b16 %v405
      %v593 = vunpack.c.l.b16 %v406
      %v594 = vunpack.c.l.b16 %v407
      %v595 = vunpack.c.l.b16 %v408
      %v596 = vunpack.c.l.b16 %v409
      %v597 = vunpack.c.l.b16 %v410
      %v598 = vunpack.c.l.b16 %v411
      %v599 = vunpack.c.l.b16 %v412
      %v600 = vpack.c.b16 %v583, %v582
      %v601 = vpack.c.b16 %v585, %v584
      %v602 = vpack.c.b16 %v587, %v586
      %v603 = vpack.c.b16 %v589, %v588
      %v604 = vpack.c.b16 %v591, %v590
      %v605 = vpack.c.b16 %v593, %v592
      %v606 = vpack.c.b16 %v595, %v594
      %v607 = vpack.c.b16 %v597, %v596
      %v608 = vpack.c.b16 %v599, %v598
      %vm618 = vcmask 130048
      %v620 = vsel %vm618, %v517, 0
      %v623 = vsel %vm618, %v519, 0
      %v626 = vsel %vm618, %v521, 0
      %v629 = vsel %vm618, %v523, 0
      %v632 = vsel %vm618, %v525, 0
      %v635 = vsel %vm618, %v527, 0
      %v638 = vsel %vm618, %v529, 0
      %v641 = vsel %vm618, %v531, 0
      %v644 = vsel %vm618, %v533, 0
      %v647 = vsel %vm618, %v535, 0
      %v650 = vsel %vm618, %v537, 0
      %v653 = vsel %vm618, %v539, 0
      %v656 = vsel %vm618, %v541, 0
      %v659 = vsel %vm618, %v543, 0
      %v662 = vsel %vm618, %v545, 0
      %v665 = vsel %vm618, %v547, 0
      %667 = vmatprep.subr.bf16.mxu0 0
      %668 = vmatpush1.bf16.msra.mxu0 %v607
      %669 = vmatprep.subr.bf16.mxu0 0
      %670 = vmatpush1.bf16.msra.mxu0 %v606
      %671 = vmatprep.subr.bf16.mxu0 0
      %672 = vmatpush1.bf16.msra.mxu0 %v605
      %673 = vmatprep.subr.bf16.mxu0 0
      %674 = vmatpush1.bf16.msra.mxu0 %v604
      %675 = vmatprep.subr.bf16.mxu0 0
      %676 = vmatpush1.bf16.msra.mxu0 %v603
      %677 = vmatprep.subr.bf16.mxu0 0
      %678 = vmatpush1.bf16.msra.mxu0 %v602
      %679 = vmatprep.subr.bf16.mxu0 0
      %680 = vmatpush1.bf16.msra.mxu0 %v601
      %681 = vmatprep.subr.bf16.mxu0 0
      %682 = vmatpush1.bf16.msra.mxu0 %v600
      %683 = vmatprep.subr.bf16.mxu0 0
      %684 = vmatpush2.bf16.msra.mxu0 0
      %685 = vmatprep.subr.bf16.mxu0 0
      %686 = vmatpush2.bf16.msra.mxu0 0
      %687 = vmatprep.subr.bf16.mxu0 0
      %688 = vmatpush2.bf16.msra.mxu0 0
      %689 = vmatprep.subr.bf16.mxu0 0
      %690 = vmatpush2.bf16.msra.mxu0 0
      %691 = vmatprep.subr.bf16.mxu0 0
      %692 = vmatpush2.bf16.msra.mxu0 0
      %693 = vmatprep.subr.bf16.mxu0 0
      %694 = vmatpush2.bf16.msra.mxu0 0
      %695 = vmatprep.subr.bf16.mxu0 0
      %696 = vmatpush2.bf16.msra.mxu0 0
      %697 = vmatprep.subr.bf16.mxu0 0
      %698 = vmatpush2.bf16.msra.mxu0 %v608
      %699 = vmatprep.mubr.bf16.mxu0 %v620
      %700 = vmatmul.mubr.bf16.gmra.mxu0 %v516
      %v701 = vpop.f32.mrf.mxu0
      %v702 = vadd.f32 %v418, %v701
      %v703 = vpop.f32.mrf.mxu0
      %v704 = vpop.f32.mrf.mxu0
      %v705 = vadd.f32 %v418, %v704
      %v706 = vpop.f32.mrf.mxu0
      %707 = vmatprep.mubr.bf16.mxu0 %v623
      %708 = vmatmul.mubr.bf16.gmra.mxu0 %v518
      %v709 = vpop.f32.mrf.mxu0
      %v710 = vadd.f32 %v418, %v709
      %v711 = vpop.f32.mrf.mxu0
      %v712 = vpop.f32.mrf.mxu0
      %v713 = vadd.f32 %v418, %v712
      %v714 = vpop.f32.mrf.mxu0
      %715 = vmatprep.mubr.bf16.mxu0 %v626
      %716 = vmatmul.mubr.bf16.gmra.mxu0 %v520
      %v717 = vpop.f32.mrf.mxu0
      %v718 = vadd.f32 %v418, %v717
      %v719 = vpop.f32.mrf.mxu0
      %v720 = vpop.f32.mrf.mxu0
      %v721 = vadd.f32 %v418, %v720
      %v722 = vpop.f32.mrf.mxu0
      %723 = vmatprep.mubr.bf16.mxu0 %v629
      %724 = vmatmul.mubr.bf16.gmra.mxu0 %v522
      %v725 = vpop.f32.mrf.mxu0
      %v726 = vadd.f32 %v418, %v725
      %v727 = vpop.f32.mrf.mxu0
      %v728 = vpop.f32.mrf.mxu0
      %v729 = vadd.f32 %v418, %v728
      %v730 = vpop.f32.mrf.mxu0
      %731 = vmatprep.mubr.bf16.mxu0 %v632
      %732 = vmatmul.mubr.bf16.gmra.mxu0 %v524
      %v733 = vpop.f32.mrf.mxu0
      %v734 = vadd.f32 %v418, %v733
      %v735 = vpop.f32.mrf.mxu0
      %v736 = vpop.f32.mrf.mxu0
      %v737 = vadd.f32 %v418, %v736
      %v738 = vpop.f32.mrf.mxu0
      %739 = vmatprep.mubr.bf16.mxu0 %v635
      %740 = vmatmul.mubr.bf16.gmra.mxu0 %v526
      %v741 = vpop.f32.mrf.mxu0
      %v742 = vadd.f32 %v418, %v741
      %v743 = vpop.f32.mrf.mxu0
      %v744 = vpop.f32.mrf.mxu0
      %v745 = vadd.f32 %v418, %v744
      %v746 = vpop.f32.mrf.mxu0
      %747 = vmatprep.mubr.bf16.mxu0 %v638
      %748 = vmatmul.mubr.bf16.gmra.mxu0 %v528
      %v749 = vpop.f32.mrf.mxu0
      %v750 = vadd.f32 %v418, %v749
      %v751 = vpop.f32.mrf.mxu0
      %v752 = vpop.f32.mrf.mxu0
      %v753 = vadd.f32 %v418, %v752
      %v754 = vpop.f32.mrf.mxu0
      %755 = vmatprep.mubr.bf16.mxu0 %v641
      %756 = vmatmul.mubr.bf16.gmra.mxu0 %v530
      %v757 = vpop.f32.mrf.mxu0
      %v758 = vadd.f32 %v418, %v757
      %v759 = vpop.f32.mrf.mxu0
      %v760 = vpop.f32.mrf.mxu0
      %v761 = vadd.f32 %v418, %v760
      %v762 = vpop.f32.mrf.mxu0
      %763 = vmatprep.mubr.bf16.mxu0 %v644
      %764 = vmatmul.mubr.bf16.gmra.mxu0 %v532
      %v765 = vpop.f32.mrf.mxu0
      %v766 = vadd.f32 %v418, %v765
      %v767 = vpop.f32.mrf.mxu0
      %v768 = vpop.f32.mrf.mxu0
      %v769 = vadd.f32 %v418, %v768
      %v770 = vpop.f32.mrf.mxu0
      %771 = vmatprep.mubr.bf16.mxu0 %v647
      %772 = vmatmul.mubr.bf16.gmra.mxu0 %v534
      %v773 = vpop.f32.mrf.mxu0
      %v774 = vadd.f32 %v418, %v773
      %v775 = vpop.f32.mrf.mxu0
      %v776 = vpop.f32.mrf.mxu0
      %v777 = vadd.f32 %v418, %v776
      %v778 = vpop.f32.mrf.mxu0
      %779 = vmatprep.mubr.bf16.mxu0 %v650
      %780 = vmatmul.mubr.bf16.gmra.mxu0 %v536
      %v781 = vpop.f32.mrf.mxu0
      %v782 = vadd.f32 %v418, %v781
      %v783 = vpop.f32.mrf.mxu0
      %v784 = vpop.f32.mrf.mxu0
      %v785 = vadd.f32 %v418, %v784
      %v786 = vpop.f32.mrf.mxu0
      %787 = vmatprep.mubr.bf16.mxu0 %v653
      %788 = vmatmul.mubr.bf16.gmra.mxu0 %v538
      %v789 = vpop.f32.mrf.mxu0
      %v790 = vadd.f32 %v418, %v789
      %v791 = vpop.f32.mrf.mxu0
      %v792 = vpop.f32.mrf.mxu0
      %v793 = vadd.f32 %v418, %v792
      %v794 = vpop.f32.mrf.mxu0
      %795 = vmatprep.mubr.bf16.mxu0 %v656
      %796 = vmatmul.mubr.bf16.gmra.mxu0 %v540
      %v797 = vpop.f32.mrf.mxu0
      %v798 = vadd.f32 %v418, %v797
      %v799 = vpop.f32.mrf.mxu0
      %v800 = vpop.f32.mrf.mxu0
      %v801 = vadd.f32 %v418, %v800
      %v802 = vpop.f32.mrf.mxu0
      %803 = vmatprep.mubr.bf16.mxu0 %v659
      %804 = vmatmul.mubr.bf16.gmra.mxu0 %v542
      %v805 = vpop.f32.mrf.mxu0
      %v806 = vadd.f32 %v418, %v805
      %v807 = vpop.f32.mrf.mxu0
      %v808 = vpop.f32.mrf.mxu0
      %v809 = vadd.f32 %v418, %v808
      %v810 = vpop.f32.mrf.mxu0
      %811 = vmatprep.mubr.bf16.mxu0 %v662
      %812 = vmatmul.mubr.bf16.gmra.mxu0 %v544
      %v813 = vpop.f32.mrf.mxu0
      %v814 = vadd.f32 %v418, %v813
      %v815 = vpop.f32.mrf.mxu0
      %v816 = vpop.f32.mrf.mxu0
      %v817 = vadd.f32 %v418, %v816
      %v818 = vpop.f32.mrf.mxu0
      %819 = vmatprep.mubr.bf16.mxu0 %v665
      %820 = vmatmul.mubr.bf16.gmra.mxu0 %v546
      %v821 = vpop.f32.mrf.mxu0
      %v822 = vadd.f32 %v418, %v821
      %v823 = vpop.f32.mrf.mxu0
      %v824 = vpop.f32.mrf.mxu0
      %v825 = vadd.f32 %v418, %v824
      %v826 = vpop.f32.mrf.mxu0
      %827 = vdwg.mxu0
      %v828 = vld [vmem:[%s344] sm:$0xf]
      %v829 = vld [vmem:[%s344 + $0x4] sm:$0xf]
      %v830 = vld [vmem:[%s344 + $0x8] sm:$0xf]
      %v831 = vld [vmem:[%s344 + $0xc] sm:$0xf]
      %v832 = vld [vmem:[%s344 + $0x10] sm:$0xf]
      %v833 = vld [vmem:[%s344 + $0x14] sm:$0xf]
      %v834 = vld [vmem:[%s344 + $0x18] sm:$0xf]
      %v835 = vld [vmem:[%s344 + $0x1c] sm:$0xf]
      %v836 = vld [vmem:[%s344 + $0x20] sm:$0xf]
      %v837 = vld [vmem:[%s344 + $0x24] sm:$0xf]
      %v838 = vld [vmem:[%s344 + $0x28] sm:$0xf]
      %v839 = vld [vmem:[%s344 + $0x2c] sm:$0xf]
      %v840 = vld [vmem:[%s344 + $0x30] sm:$0xf]
      %v841 = vld [vmem:[%s344 + $0x34] sm:$0xf]
      %v842 = vld [vmem:[%s344 + $0x38] sm:$0xf]
      %v843 = vld [vmem:[%s344 + $0x3c] sm:$0xf]
      %v844 = vld [vmem:[%s344 + $0x40] sm:$0xf]
      %v845 = vld [vmem:[%s344 + $0x44] sm:$0xf]
      %v846 = vld [vmem:[%s344 + $0x48] sm:$0xf]
      %v847 = vld [vmem:[%s344 + $0x4c] sm:$0xf]
      %v848 = vld [vmem:[%s344 + $0x50] sm:$0xf]
      %v849 = vld [vmem:[%s344 + $0x54] sm:$0xf]
      %v850 = vld [vmem:[%s344 + $0x58] sm:$0xf]
      %v851 = vld [vmem:[%s344 + $0x5c] sm:$0xf]
      %v852 = vld [vmem:[%s344 + $0x60] sm:$0xf]
      %v853 = vld [vmem:[%s344 + $0x64] sm:$0xf]
      %v854 = vld [vmem:[%s344 + $0x68] sm:$0xf]
      %v855 = vld [vmem:[%s344 + $0x6c] sm:$0xf]
      %v856 = vld [vmem:[%s344 + $0x70] sm:$0xf]
      %v857 = vld [vmem:[%s344 + $0x74] sm:$0xf]
      %v858 = vld [vmem:[%s344 + $0x78] sm:$0xf]
      %v859 = vld [vmem:[%s344 + $0x7c] sm:$0xf]
      %v860 = vld [vmem:[%s349] sm:$0xf]
      %v893 = vunpack.c.l.b16 %v828
      %v894 = vunpack.c.l.b16 %v829
      %v895 = vunpack.c.l.b16 %v830
      %v896 = vunpack.c.l.b16 %v831
      %v897 = vunpack.c.l.b16 %v832
      %v898 = vunpack.c.l.b16 %v833
      %v899 = vunpack.c.l.b16 %v834
      %v900 = vunpack.c.l.b16 %v835
      %v901 = vunpack.c.l.b16 %v836
      %v902 = vunpack.c.l.b16 %v837
      %v903 = vunpack.c.l.b16 %v838
      %v904 = vunpack.c.l.b16 %v839
      %v905 = vunpack.c.l.b16 %v840
      %v906 = vunpack.c.l.b16 %v841
      %v907 = vunpack.c.l.b16 %v842
      %v908 = vunpack.c.l.b16 %v843
      %v909 = vunpack.c.l.b16 %v844
      %v910 = vunpack.c.l.b16 %v845
      %v911 = vunpack.c.l.b16 %v846
      %v912 = vunpack.c.l.b16 %v847
      %v913 = vunpack.c.l.b16 %v848
      %v914 = vunpack.c.l.b16 %v849
      %v915 = vunpack.c.l.b16 %v850
      %v916 = vunpack.c.l.b16 %v851
      %v917 = vunpack.c.l.b16 %v852
      %v918 = vunpack.c.l.b16 %v853
      %v919 = vunpack.c.l.b16 %v854
      %v920 = vunpack.c.l.b16 %v855
      %v921 = vunpack.c.l.b16 %v856
      %v922 = vunpack.c.l.b16 %v857
      %v923 = vunpack.c.l.b16 %v858
      %v924 = vunpack.c.l.b16 %v859
      %v925 = vpack.c.b16 %v894, %v893
      %v926 = vpack.c.b16 %v896, %v895
      %v927 = vpack.c.b16 %v898, %v897
      %v928 = vpack.c.b16 %v900, %v899
      %v929 = vpack.c.b16 %v902, %v901
      %v930 = vpack.c.b16 %v904, %v903
      %v931 = vpack.c.b16 %v906, %v905
      %v932 = vpack.c.b16 %v908, %v907
      %v933 = vpack.c.b16 %v910, %v909
      %v934 = vpack.c.b16 %v912, %v911
      %v935 = vpack.c.b16 %v914, %v913
      %v936 = vpack.c.b16 %v916, %v915
      %v937 = vpack.c.b16 %v918, %v917
      %v938 = vpack.c.b16 %v920, %v919
      %v939 = vpack.c.b16 %v922, %v921
      %v940 = vpack.c.b16 %v924, %v923
      %vm941 = vcmask 64512
      %v943 = vsel %vm941, %v925, 0
      %v946 = vsel %vm941, %v926, 0
      %v949 = vsel %vm941, %v927, 0
      %v952 = vsel %vm941, %v928, 0
      %v955 = vsel %vm941, %v929, 0
      %v958 = vsel %vm941, %v930, 0
      %v961 = vsel %vm941, %v931, 0
      %v964 = vsel %vm941, %v932, 0
      %v967 = vsel %vm941, %v933, 0
      %v970 = vsel %vm941, %v934, 0
      %v973 = vsel %vm941, %v935, 0
      %v976 = vsel %vm941, %v936, 0
      %v979 = vsel %vm941, %v937, 0
      %v982 = vsel %vm941, %v938, 0
      %v985 = vsel %vm941, %v939, 0
      %v988 = vsel %vm941, %v940, 0
      %vm990 = vcmask 1043456
      %v992 = vsel %vm990, %v860, 0
      %994 = vmatprep.subr.bf16.mxu0 0
      %995 = vmatpush1.bf16.msra.mxu0 0
      %996 = vmatprep.subr.bf16.mxu0 0
      %997 = vmatpush1.bf16.msra.mxu0 0
      %998 = vmatprep.subr.bf16.mxu0 0
      %999 = vmatpush1.bf16.msra.mxu0 0
      %1000 = vmatprep.subr.bf16.mxu0 0
      %1001 = vmatpush1.bf16.msra.mxu0 0
      %1002 = vmatprep.subr.bf16.mxu0 0
      %1003 = vmatpush1.bf16.msra.mxu0 0
      %1004 = vmatprep.subr.bf16.mxu0 0
      %1005 = vmatpush1.bf16.msra.mxu0 0
      %1006 = vmatprep.subr.bf16.mxu0 0
      %1007 = vmatpush1.bf16.msra.mxu0 0
      %1008 = vmatprep.subr.bf16.mxu0 0
      %1009 = vmatpush1.bf16.msra.mxu0 %v992
      %1010 = vmatprep.subr.bf16.mxu0 0
      %1011 = vmatpush2.bf16.msra.mxu0 0
      %1012 = vmatprep.subr.bf16.mxu0 0
      %1013 = vmatpush2.bf16.msra.mxu0 0
      %1014 = vmatprep.subr.bf16.mxu0 0
      %1015 = vmatpush2.bf16.msra.mxu0 0
      %1016 = vmatprep.subr.bf16.mxu0 0
      %1017 = vmatpush2.bf16.msra.mxu0 0
      %1018 = vmatprep.subr.bf16.mxu0 0
      %1019 = vmatpush2.bf16.msra.mxu0 0
      %1020 = vmatprep.subr.bf16.mxu0 0
      %1021 = vmatpush2.bf16.msra.mxu0 0
      %1022 = vmatprep.subr.bf16.mxu0 0
      %1023 = vmatpush2.bf16.msra.mxu0 0
      %1024 = vmatprep.subr.bf16.mxu0 0
      %1025 = vmatpush2.bf16.msra.mxu0 0
      %1026 = vmatprep.mubr.bf16.mxu0 0
      %1027 = vmatmul.mubr.bf16.gmra.mxu0 %v943
      %v1028 = vpop.f32.mrf.mxu0
      %v1029 = vadd.f32 0.0, %v1028
      %v1030 = vpop.f32.mrf.mxu0
      %v1031 = vpop.f32.mrf.mxu0
      %v1032 = vadd.f32 0.0, %v1031
      %v1033 = vpop.f32.mrf.mxu0
      %1034 = vmatprep.mubr.bf16.mxu0 0
      %1035 = vmatmul.mubr.bf16.gmra.mxu0 %v946
      %v1036 = vpop.f32.mrf.mxu0
      %v1037 = vadd.f32 0.0, %v1036
      %v1038 = vpop.f32.mrf.mxu0
      %v1039 = vpop.f32.mrf.mxu0
      %v1040 = vadd.f32 0.0, %v1039
      %v1041 = vpop.f32.mrf.mxu0
      %1042 = vmatprep.mubr.bf16.mxu0 0
      %1043 = vmatmul.mubr.bf16.gmra.mxu0 %v949
      %v1044 = vpop.f32.mrf.mxu0
      %v1045 = vadd.f32 0.0, %v1044
      %v1046 = vpop.f32.mrf.mxu0
      %v1047 = vpop.f32.mrf.mxu0
      %v1048 = vadd.f32 0.0, %v1047
      %v1049 = vpop.f32.mrf.mxu0
      %1050 = vmatprep.mubr.bf16.mxu0 0
      %1051 = vmatmul.mubr.bf16.gmra.mxu0 %v952
      %v1052 = vpop.f32.mrf.mxu0
      %v1053 = vadd.f32 0.0, %v1052
      %v1054 = vpop.f32.mrf.mxu0
      %v1055 = vpop.f32.mrf.mxu0
      %v1056 = vadd.f32 0.0, %v1055
      %v1057 = vpop.f32.mrf.mxu0
      %1058 = vmatprep.mubr.bf16.mxu0 0
      %1059 = vmatmul.mubr.bf16.gmra.mxu0 %v955
      %v1060 = vpop.f32.mrf.mxu0
      %v1061 = vadd.f32 0.0, %v1060
      %v1062 = vpop.f32.mrf.mxu0
      %v1063 = vpop.f32.mrf.mxu0
      %v1064 = vadd.f32 0.0, %v1063
      %v1065 = vpop.f32.mrf.mxu0
      %1066 = vmatprep.mubr.bf16.mxu0 0
      %1067 = vmatmul.mubr.bf16.gmra.mxu0 %v958
      %v1068 = vpop.f32.mrf.mxu0
      %v1069 = vadd.f32 0.0, %v1068
      %v1070 = vpop.f32.mrf.mxu0
      %v1071 = vpop.f32.mrf.mxu0
      %v1072 = vadd.f32 0.0, %v1071
      %v1073 = vpop.f32.mrf.mxu0
      %1074 = vmatprep.mubr.bf16.mxu0 0
      %1075 = vmatmul.mubr.bf16.gmra.mxu0 %v961
      %v1076 = vpop.f32.mrf.mxu0
      %v1077 = vadd.f32 0.0, %v1076
      %v1078 = vpop.f32.mrf.mxu0
      %v1079 = vpop.f32.mrf.mxu0
      %v1080 = vadd.f32 0.0, %v1079
      %v1081 = vpop.f32.mrf.mxu0
      %1082 = vmatprep.mubr.bf16.mxu0 0
      %1083 = vmatmul.mubr.bf16.gmra.mxu0 %v964
      %v1084 = vpop.f32.mrf.mxu0
      %v1085 = vadd.f32 0.0, %v1084
      %v1086 = vpop.f32.mrf.mxu0
      %v1087 = vpop.f32.mrf.mxu0
      %v1088 = vadd.f32 0.0, %v1087
      %v1089 = vpop.f32.mrf.mxu0
      %1090 = vmatprep.mubr.bf16.mxu0 0
      %1091 = vmatmul.mubr.bf16.gmra.mxu0 %v967
      %v1092 = vpop.f32.mrf.mxu0
      %v1093 = vadd.f32 0.0, %v1092
      %v1094 = vpop.f32.mrf.mxu0
      %v1095 = vpop.f32.mrf.mxu0
      %v1096 = vadd.f32 0.0, %v1095
      %v1097 = vpop.f32.mrf.mxu0
      %1098 = vmatprep.mubr.bf16.mxu0 0
      %1099 = vmatmul.mubr.bf16.gmra.mxu0 %v970
      %v1100 = vpop.f32.mrf.mxu0
      %v1101 = vadd.f32 0.0, %v1100
      %v1102 = vpop.f32.mrf.mxu0
      %v1103 = vpop.f32.mrf.mxu0
      %v1104 = vadd.f32 0.0, %v1103
      %v1105 = vpop.f32.mrf.mxu0
      %1106 = vmatprep.mubr.bf16.mxu0 0
      %1107 = vmatmul.mubr.bf16.gmra.mxu0 %v973
      %v1108 = vpop.f32.mrf.mxu0
      %v1109 = vadd.f32 0.0, %v1108
      %v1110 = vpop.f32.mrf.mxu0
      %v1111 = vpop.f32.mrf.mxu0
      %v1112 = vadd.f32 0.0, %v1111
      %v1113 = vpop.f32.mrf.mxu0
      %1114 = vmatprep.mubr.bf16.mxu0 0
      %1115 = vmatmul.mubr.bf16.gmra.mxu0 %v976
      %v1116 = vpop.f32.mrf.mxu0
      %v1117 = vadd.f32 0.0, %v1116
      %v1118 = vpop.f32.mrf.mxu0
      %v1119 = vpop.f32.mrf.mxu0
      %v1120 = vadd.f32 0.0, %v1119
      %v1121 = vpop.f32.mrf.mxu0
      %1122 = vmatprep.mubr.bf16.mxu0 0
      %1123 = vmatmul.mubr.bf16.gmra.mxu0 %v979
      %v1124 = vpop.f32.mrf.mxu0
      %v1125 = vadd.f32 0.0, %v1124
      %v1126 = vpop.f32.mrf.mxu0
      %v1127 = vpop.f32.mrf.mxu0
      %v1128 = vadd.f32 0.0, %v1127
      %v1129 = vpop.f32.mrf.mxu0
      %1130 = vmatprep.mubr.bf16.mxu0 0
      %1131 = vmatmul.mubr.bf16.gmra.mxu0 %v982
      %v1132 = vpop.f32.mrf.mxu0
      %v1133 = vadd.f32 0.0, %v1132
      %v1134 = vpop.f32.mrf.mxu0
      %v1135 = vpop.f32.mrf.mxu0
      %v1136 = vadd.f32 0.0, %v1135
      %v1137 = vpop.f32.mrf.mxu0
      %1138 = vmatprep.mubr.bf16.mxu0 0
      %1139 = vmatmul.mubr.bf16.gmra.mxu0 %v985
      %v1140 = vpop.f32.mrf.mxu0
      %v1141 = vadd.f32 0.0, %v1140
      %v1142 = vpop.f32.mrf.mxu0
      %v1143 = vpop.f32.mrf.mxu0
      %v1144 = vadd.f32 0.0, %v1143
      %v1145 = vpop.f32.mrf.mxu0
      %1146 = vmatprep.mubr.bf16.mxu0 0
      %1147 = vmatmul.mubr.bf16.gmra.mxu0 %v988
      %v1148 = vpop.f32.mrf.mxu0
      %v1149 = vadd.f32 0.0, %v1148
      %v1150 = vpop.f32.mrf.mxu0
      %v1151 = vpop.f32.mrf.mxu0
      %v1152 = vadd.f32 0.0, %v1151
      %v1153 = vpop.f32.mrf.mxu0
      %1154 = vdwg.mxu0
      %v1155 = vadd.f32 %v702, %v1029
      %v1156 = vadd.f32 %v705, %v1032
      %v1157 = vadd.f32 %v710, %v1037
      %v1158 = vadd.f32 %v713, %v1040
      %v1159 = vadd.f32 %v718, %v1045
      %v1160 = vadd.f32 %v721, %v1048
      %v1161 = vadd.f32 %v726, %v1053
      %v1162 = vadd.f32 %v729, %v1056
      %v1163 = vadd.f32 %v734, %v1061
      %v1164 = vadd.f32 %v737, %v1064
      %v1165 = vadd.f32 %v742, %v1069
      %v1166 = vadd.f32 %v745, %v1072
      %v1167 = vadd.f32 %v750, %v1077
      %v1168 = vadd.f32 %v753, %v1080
      %v1169 = vadd.f32 %v758, %v1085
      %v1170 = vadd.f32 %v761, %v1088
      %v1171 = vadd.f32 %v766, %v1093
      %v1172 = vadd.f32 %v769, %v1096
      %v1173 = vadd.f32 %v774, %v1101
      %v1174 = vadd.f32 %v777, %v1104
      %v1175 = vadd.f32 %v782, %v1109
      %v1176 = vadd.f32 %v785, %v1112
      %v1177 = vadd.f32 %v790, %v1117
      %v1178 = vadd.f32 %v793, %v1120
      %v1179 = vadd.f32 %v798, %v1125
      %v1180 = vadd.f32 %v801, %v1128
      %v1181 = vadd.f32 %v806, %v1133
      %v1182 = vadd.f32 %v809, %v1136
      %v1183 = vadd.f32 %v814, %v1141
      %v1184 = vadd.f32 %v817, %v1144
      %v1185 = vadd.f32 %v822, %v1149
      %v1186 = vadd.f32 %v825, %v1152
      %v1187 = vld [vmem:[%s352] sm:$0x1]
      %v1189 = vlaneseq
      %v1190 = vshrl.u32 %v1189, 7
      %v1191 = vsub.s32 0, %v1190
      %v1192 = vrot.slane %v1187, %v1191
      %v1194 = vadd.f32 %v1155, %v1192
      %v1195 = vadd.f32 %v1156, %v1192
      %v1196 = vadd.f32 %v1157, %v1192
      %v1197 = vadd.f32 %v1158, %v1192
      %v1198 = vadd.f32 %v1159, %v1192
      %v1199 = vadd.f32 %v1160, %v1192
      %v1200 = vadd.f32 %v1161, %v1192
      %v1201 = vadd.f32 %v1162, %v1192
      %v1202 = vadd.f32 %v1163, %v1192
      %v1203 = vadd.f32 %v1164, %v1192
      %v1204 = vadd.f32 %v1165, %v1192
      %v1205 = vadd.f32 %v1166, %v1192
      %v1206 = vadd.f32 %v1167, %v1192
      %v1207 = vadd.f32 %v1168, %v1192
      %v1208 = vadd.f32 %v1169, %v1192
      %v1209 = vadd.f32 %v1170, %v1192
      %v1210 = vadd.f32 %v1171, %v1192
      %v1211 = vadd.f32 %v1172, %v1192
      %v1212 = vadd.f32 %v1173, %v1192
      %v1213 = vadd.f32 %v1174, %v1192
      %v1214 = vadd.f32 %v1175, %v1192
      %v1215 = vadd.f32 %v1176, %v1192
      %v1216 = vadd.f32 %v1177, %v1192
      %v1217 = vadd.f32 %v1178, %v1192
      %v1218 = vadd.f32 %v1179, %v1192
      %v1219 = vadd.f32 %v1180, %v1192
      %v1220 = vadd.f32 %v1181, %v1192
      %v1221 = vadd.f32 %v1182, %v1192
      %v1222 = vadd.f32 %v1183, %v1192
      %v1223 = vadd.f32 %v1184, %v1192
      %v1224 = vadd.f32 %v1185, %v1192
      %v1225 = vadd.f32 %v1186, %v1192
      %v1226 = vmax.f32 %v1194, 0.0
      %v1227 = vmax.f32 %v1195, 0.0
      %v1228 = vmax.f32 %v1196, 0.0
      %v1229 = vmax.f32 %v1197, 0.0
      %v1230 = vmax.f32 %v1198, 0.0
      %v1231 = vmax.f32 %v1199, 0.0
      %v1232 = vmax.f32 %v1200, 0.0
      %v1233 = vmax.f32 %v1201, 0.0
      %v1234 = vmax.f32 %v1202, 0.0
      %v1235 = vmax.f32 %v1203, 0.0
      %v1236 = vmax.f32 %v1204, 0.0
      %v1237 = vmax.f32 %v1205, 0.0
      %v1238 = vmax.f32 %v1206, 0.0
      %v1239 = vmax.f32 %v1207, 0.0
      %v1240 = vmax.f32 %v1208, 0.0
      %v1241 = vmax.f32 %v1209, 0.0
      %v1242 = vmax.f32 %v1210, 0.0
      %v1243 = vmax.f32 %v1211, 0.0
      %v1244 = vmax.f32 %v1212, 0.0
      %v1245 = vmax.f32 %v1213, 0.0
      %v1246 = vmax.f32 %v1214, 0.0
      %v1247 = vmax.f32 %v1215, 0.0
      %v1248 = vmax.f32 %v1216, 0.0
      %v1249 = vmax.f32 %v1217, 0.0
      %v1250 = vmax.f32 %v1218, 0.0
      %v1251 = vmax.f32 %v1219, 0.0
      %v1252 = vmax.f32 %v1220, 0.0
      %v1253 = vmax.f32 %v1221, 0.0
      %v1254 = vmax.f32 %v1222, 0.0
      %v1255 = vmax.f32 %v1223, 0.0
      %v1256 = vmax.f32 %v1224, 0.0
      %v1257 = vmax.f32 %v1225, 0.0
      %1258 = vst [vmem:[%s360] sm:$0xff] %v1226
      %1259 = vst [vmem:[%s360 + $0x8] sm:$0xff] %v1227
      %1260 = vst [vmem:[%s360 + $0x10] sm:$0xff] %v1228
      %1261 = vst [vmem:[%s360 + $0x18] sm:$0xff] %v1229
      %1262 = vst [vmem:[%s360 + $0x20] sm:$0xff] %v1230
      %1263 = vst [vmem:[%s360 + $0x28] sm:$0xff] %v1231
      %1264 = vst [vmem:[%s360 + $0x30] sm:$0xff] %v1232
      %1265 = vst [vmem:[%s360 + $0x38] sm:$0xff] %v1233
      %1266 = vst [vmem:[%s360 + $0x40] sm:$0xff] %v1234
      %1267 = vst [vmem:[%s360 + $0x48] sm:$0xff] %v1235
      %1268 = vst [vmem:[%s360 + $0x50] sm:$0xff] %v1236
      %1269 = vst [vmem:[%s360 + $0x58] sm:$0xff] %v1237
      %1270 = vst [vmem:[%s360 + $0x60] sm:$0xff] %v1238
      %1271 = vst [vmem:[%s360 + $0x68] sm:$0xff] %v1239
      %1272 = vst [vmem:[%s360 + $0x70] sm:$0xff] %v1240
      %1273 = vst [vmem:[%s360 + $0x78] sm:$0xff] %v1241
      %1274 = vst [vmem:[%s360 + $0x80] sm:$0xff] %v1242
      %1275 = vst [vmem:[%s360 + $0x88] sm:$0xff] %v1243
      %1276 = vst [vmem:[%s360 + $0x90] sm:$0xff] %v1244
      %1277 = vst [vmem:[%s360 + $0x98] sm:$0xff] %v1245
      %1278 = vst [vmem:[%s360 + $0xa0] sm:$0xff] %v1246
      %1279 = vst [vmem:[%s360 + $0xa8] sm:$0xff] %v1247
      %1280 = vst [vmem:[%s360 + $0xb0] sm:$0xff] %v1248
      %1281 = vst [vmem:[%s360 + $0xb8] sm:$0xff] %v1249
      %1282 = vst [vmem:[%s360 + $0xc0] sm:$0xff] %v1250
      %1283 = vst [vmem:[%s360 + $0xc8] sm:$0xff] %v1251
      %1284 = vst [vmem:[%s360 + $0xd0] sm:$0xff] %v1252
      %1285 = vst [vmem:[%s360 + $0xd8] sm:$0xff] %v1253
      %1286 = vst [vmem:[%s360 + $0xe0] sm:$0xff] %v1254
      %1287 = vst [vmem:[%s360 + $0xe8] sm:$0xff] %v1255
      %1288 = vst [vmem:[%s360 + $0xf0] sm:$0xff] %v1256
      %1289 = vst [vmem:[%s360 + $0xf8] sm:$0xff] %v1257
      %s1290 = smul.u32 32, %s21
      %p1291 = scmp.lt.s32.totalorder %s1290, 63
      %s1292 = scalar_select %p1291, %s1290, 63
      %p1293 = scmp.lt.s32.totalorder %s22, 0
      %s1294 = scalar_select %p1293, %s22, 0
      %s1295 = sadd.s32 %s1294, %s1292
      %s1296 = smul.addr %s1295, 8
      %s1297 = scalar_lea.vmem %s6, %s1296
      // Predicated region
      $region45: #{wide_basic_block_forward.3} parent=43 // pred_check
        %p1298 = pneg %p205
      $region46: #{wide_basic_block_forward.3} parent=43 // pred_check_branch
        %1300 = sbr.rel (%p1298) target = $region48
      $region47: #{wide_basic_block_forward.3} parent=43 // pred_region
        %s1301 = smul.u32 32, %s21
      $region48: #{wide_basic_block_forward.3} parent=43 // pred_fallthru
        _
    $region44: #{wide_basic_block_forward.3} parent=5 // pred_fallthru
      _
    %p1302 = scmp.le.s32.totalorder 2, %s12
    // Predicated region
    $region49: #{wide_basic_block_forward.3} parent=5 // pred_check
      %p1303 = pneg %p1302
    $region50: #{wide_basic_block_forward.3} parent=5 // pred_check_branch
      %1305 = sbr.rel (%p1303) target = $region52
    $region51: #{wide_basic_block_forward.3} parent=5 // pred_region
      %s1306 = ssub.s32 %s12, 2
      // Predicated region
      $region53: #{wide_basic_block_forward.3} parent=51 // pred_check
        %p1307 = pneg %p211
      $region54: #{wide_basic_block_forward.3} parent=51 // pred_check_branch
        %1309 = sbr.rel (%p1307) target = $region56
      $region55: #{wide_basic_block_forward.3} parent=51 // pred_region
        %s1310 = smul.u32 32, %s23
        %p1311 = scmp.lt.s32.totalorder %s1310, 63
        %s1312 = scalar_select %p1311, %s1310, 63
        %p1313 = scmp.lt.s32.totalorder %s24, 0
        %s1314 = scalar_select %p1313, %s24, 0
        %s1315 = sadd.s32 %s1314, %s1312
        %s1316 = smul.addr %s1315, 8
        %s1317 = scalar_lea.vmem %s6, %s1316
      $region56: #{wide_basic_block_forward.3} parent=51 // pred_fallthru
        _
    $region52: #{wide_basic_block_forward.3} parent=5 // pred_fallthru
      _
  $region6: #{wide_basic_block_forward.3} parent=0 // loop_footer
    %s16 = sadd.s32 1, %s12
  $region7: #{wide_basic_block_forward.3} parent=0 // loop_footer_branch
    %11 = sbr.rel target = $region3
  $region8: #{wide_basic_block_forward.3} parent=0 // loop_exit
    _

</llo_original>
